<compile_context>
chip_gen: v7x
topology: tpu7x:2x2x1
jax: 0.10.0
libtpu: 0.0.40
codegen_flags: <defaults>
</compile_context>

<pallas_src>
import functools

import jax
import jax.numpy as jnp
from jax.experimental import pallas as pl
from jax.experimental.pallas import tpu as pltpu


# ----------------------------------------------------------------------------
# Kernel: MAM attention + residual mix (full-bank MXU formulation)
# ----------------------------------------------------------------------------
def mam_kernel(x_ref, idx_ref, key_mem_ref, value_mem_ref,
               w1_ref, b1_ref, w2_ref, b2_ref, out_ref, *, alpha, n_keys):
    # x_ref        : (TB, D)  f32
    # idx_ref      : (TB, K)  int32  top-k memory-row indices per example
    # key_mem_ref  : (M, D)   bf16   memory key bank   (VMEM-resident)
    # value_mem_ref: (M, D)   bf16   memory value bank (VMEM-resident)
    # w1_ref       : (D, D)   bf16   linear1 weight, pre-T & pre-scaled by 1/sqrt(D)
    # b1_ref       : (1, D)   f32    linear1 bias, pre-scaled by 1/sqrt(D)
    # w2_ref       : (D, D)   bf16   linear2 weight, pre-T
    # b2_ref       : (1, D)   f32    linear2 bias
    x_f32 = x_ref[...]                                        # keep f32 for residual

    # query = x @ W1 + b1 (scale already folded in)  -- bf16 MXU, f32 accumulate
    q = jnp.dot(x_f32.astype(jnp.bfloat16), w1_ref[...],
                preferred_element_type=jnp.float32)
    q = (q + b1_ref[...]).astype(jnp.bfloat16)                # (TB, D)

    # linear2 over the whole bank (commutes with the row gather).  Tiny
    # (M,D)@(D,D) MXU matmul, recomputed per grid step so each TensorCore
    # (v7x megacore) produces its own copy -- no cross-core scratch init.
    kproj = jnp.dot(key_mem_ref[...], w2_ref[...],
                    preferred_element_type=jnp.float32)
    kproj = (kproj + b2_ref[...]).astype(jnp.bfloat16)        # (M, D)

    # full-bank logits on the MXU: (TB, D) @ (D, M) -> (TB, M), f32 acc.
    logits = jnp.dot(q, kproj.T, preferred_element_type=jnp.float32)

    # mask columns outside each row's top-k set to -inf BEFORE max-subtraction
    # so exp gives exact zeros there (exactly the gathered top-k softmax).
    tb, m_sz = logits.shape
    col = jax.lax.broadcasted_iota(jnp.int32, (tb, m_sz), 1)
    idx_vals = idx_ref[...]                                   # (TB, K) int32
    keep = idx_vals[:, 0:1] == col
    for k in range(1, n_keys):                                # static K-way unroll
        keep = keep | (idx_vals[:, k:k + 1] == col)
    logits = jnp.where(keep, logits, -jnp.inf)

    # softmax over M (approx reciprocal -> EUP slot)
    row_max = jnp.max(logits, axis=-1, keepdims=True)
    e = jnp.exp(logits - row_max)
    att = e * pl.reciprocal(jnp.sum(e, axis=-1, keepdims=True), approx=True)

    # weighted sum on the MXU: (TB, M) @ (M, D) -> (TB, D), f32 acc.
    retrieved = jnp.dot(att.astype(jnp.bfloat16), value_mem_ref[...],
                        preferred_element_type=jnp.float32)

    out_ref[...] = ((1.0 - alpha) * x_f32 + alpha * retrieved).astype(out_ref.dtype)


def mam_forward(x, idx, key_mem_bf, value_mem_bf, w1s_bf, b1s, w2_bf, b2,
                *, alpha, tile_b=128):
    B, D = x.shape
    M, _ = key_mem_bf.shape
    K = idx.shape[1]
    tile_b = min(tile_b, B)
    assert B % tile_b == 0 and tile_b % 8 == 0, \
        "tile_b must divide B and be a multiple of 8"
    assert D % 128 == 0, "key_dim must be a multiple of 128 for TPU lane tiling"
    assert M % 8 == 0, "memory size must be a multiple of 8"

    kernel = functools.partial(mam_kernel, alpha=float(alpha), n_keys=int(K))

    n_tiles = B // tile_b   # keep >= 2 even "parallel" steps for v7x megacore

    cost = pl.CostEstimate(
        flops=(2 * B * D * D              # query matmul
               + 2 * n_tiles * M * D * D  # per-step bank projection
               + 4 * B * M * D            # logits + weighted sum
               + 8 * B * M + 6 * B * D),  # softmax / mask / residual elementwise
        transcendentals=B * M,
        bytes_accessed=(2 * B * D * 4        # x in + out (f32)
                        + B * K * 4          # top-k indices
                        + 2 * M * D * 2      # key/value banks (bf16)
                        + 2 * D * D * 2      # W1 + W2 (bf16)
                        + 2 * D * 4),        # b1 + b2
    )

    # Real footprint: double-buffered x/idx/out tiles + resident banks/weights
    # + in-kernel f32 temporaries.  Independent of K; a couple of MiB even at
    # tile_b=1024, so the cap stays far below v7x's 64 MiB physical VMEM.
    io_tile = 2 * tile_b * D * 4 + tile_b * max(K, 128) * 4      # x+out, idx (lane pad)
    resident = 2 * M * D * 2 + 2 * D * D * 2 + 2 * D * 4
    temps = 6 * tile_b * max(M, 128) * 4 + 4 * tile_b * D * 4
    vmem_limit = int(min(max(2 * (2 * io_tile + 2 * resident) + temps, 16 << 20),
                         48 << 20))

    return pl.pallas_call(
        kernel,
        out_shape=jax.ShapeDtypeStruct((B, D), x.dtype),
        grid_spec=pltpu.PrefetchScalarGridSpec(
            num_scalar_prefetch=0,
            grid=(n_tiles,),
            in_specs=[
                pl.BlockSpec((tile_b, D), lambda i: (i, 0)),   # x
                pl.BlockSpec((tile_b, K), lambda i: (i, 0)),   # top-k indices
                pl.BlockSpec((M, D), lambda i: (0, 0)),        # key bank (resident)
                pl.BlockSpec((M, D), lambda i: (0, 0)),        # value bank (resident)
                pl.BlockSpec((D, D), lambda i: (0, 0)),        # W1 (pre-T, pre-scaled)
                pl.BlockSpec((1, D), lambda i: (0, 0)),        # b1 (pre-scaled)
                pl.BlockSpec((D, D), lambda i: (0, 0)),        # W2 (pre-T)
                pl.BlockSpec((1, D), lambda i: (0, 0)),        # b2
            ],
            out_specs=pl.BlockSpec((tile_b, D), lambda i: (i, 0)),
        ),
        compiler_params=pltpu.CompilerParams(
            dimension_semantics=("parallel",),
            vmem_limit_bytes=vmem_limit),
        cost_estimate=cost,
    )(x, idx, key_mem_bf, value_mem_bf, w1s_bf, b1s, w2_bf, b2)


# ----------------------------------------------------------------------------
# Glue: emulate EmbedMemory.search (external CPU FAISS-style kNN) with a
# brute-force inner-product top-k.  Only the indices are needed now; the
# key/value selection happens in-kernel via the mask.
# ----------------------------------------------------------------------------
def embed_memory_search_indices(x, key_mem, *, k, ignore_first):
    # TODO(synk): the real module calls an external CPU FAISS index here.
    sims = jnp.dot(x, key_mem.T)                 # (B, M)
    n = k + 1 if ignore_first else k
    _, idx = jax.lax.top_k(sims, n)              # (B, n)
    if ignore_first:
        idx = idx[:, 1:]
    return idx.astype(jnp.int32)                 # (B, k)


if __name__ == "__main__":
    # Config mirrors the module's __init__ fields.
    config = {"k": 8, "alpha": 0.5, "ignore_first": True}
    B = 256        # batch          (grid of 2 x tile_b=128 -> both v7x TCs used)
    D = 128        # key_dim        (embed_memory.key_mem.shape[1])
    M = 64         # memory size    (embed_memory.key_mem.shape[0])
    TILE_B = 128   # raise (e.g. 512) on v6e when B permits; keep >=2 steps on v7x

    root = jax.random.PRNGKey(0)
    kx, kkm, kvm, kw1, kb1, kw2, kb2 = jax.random.split(root, 7)

    x = jax.random.normal(kx, (B, D), dtype=jnp.float32)
    key_mem = jax.random.normal(kkm, (M, D), dtype=jnp.float32)
    value_mem = jax.random.normal(kvm, (M, D), dtype=jnp.float32)

    # nn.Linear(D, D) params, stored transposed so kernels compute x @ W + b.
    bound = 1.0 / float(D) ** 0.5
    w1 = jax.random.uniform(kw1, (D, D), jnp.float32, -bound, bound)
    b1 = jax.random.uniform(kb1, (1, D), jnp.float32, -bound, bound)
    w2 = jax.random.uniform(kw2, (D, D), jnp.float32, -bound, bound)
    b2 = jax.random.uniform(kb2, (1, D), jnp.float32, -bound, bound)

    # Retrieval indices (emulates embed_memory.search on detached input).
    idx = embed_memory_search_indices(
        x, key_mem, k=config["k"], ignore_first=config["ignore_first"])

    # Parameter prep: fold 1/sqrt(key_dim) into linear1; bf16 MXU operands.
    scale = 1.0 / float(D) ** 0.5
    w1s_bf = (w1 * scale).astype(jnp.bfloat16)
    b1s = b1 * scale
    w2_bf = w2.astype(jnp.bfloat16)
    km_bf = key_mem.astype(jnp.bfloat16)
    vm_bf = value_mem.astype(jnp.bfloat16)

    out = mam_forward(x, idx, km_bf, vm_bf, w1s_bf, b1s, w2_bf, b2,
                      alpha=config["alpha"], tile_b=TILE_B)
    out = jax.block_until_ready(out)

    # Pure-JAX reference mirroring the in-kernel math (same bf16 rounding
    # points as the kernel path).
    def f32(a):
        return a.astype(jnp.float32)

    kproj_ref = f32((f32(km_bf) @ f32(w2_bf) + b2).astype(jnp.bfloat16))      # (M, D)
    q_ref = f32((f32(x.astype(jnp.bfloat16)) @ f32(w1s_bf) + b1s
                 ).astype(jnp.bfloat16))                                      # (B, D)
    logits_ref = q_ref @ kproj_ref.T                                          # (B, M)
    keep_ref = (idx[:, :, None] == jnp.arange(M)[None, None, :]).any(axis=1)  # (B, M)
    logits_ref = jnp.where(keep_ref, logits_ref, -jnp.inf)
    att_ref = jax.nn.softmax(logits_ref, axis=-1)
    retrieved_ref = f32(att_ref.astype(jnp.bfloat16)) @ f32(vm_bf)            # (B, D)
    ref = (1.0 - config["alpha"]) * x + config["alpha"] * retrieved_ref

    assert jnp.allclose(out, ref, atol=2e-2, rtol=2e-2), "mismatch vs reference"
    print("KERNEL_OK")
</pallas_src>

<mosaic_0001>
module attributes {stable_mosaic.version = 11 : i64} {
  func.func @mam_kernel(%arg0: i32, %arg1: memref<128x128xf32, #tpu.memory_space<vmem>>, %arg2: memref<128x8xi32, #tpu.memory_space<vmem>>, %arg3: memref<64x128xbf16, #tpu.memory_space<vmem>>, %arg4: memref<64x128xbf16, #tpu.memory_space<vmem>>, %arg5: memref<128x128xbf16, #tpu.memory_space<vmem>>, %arg6: memref<1x128xf32, #tpu.memory_space<vmem>>, %arg7: memref<128x128xbf16, #tpu.memory_space<vmem>>, %arg8: memref<1x128xf32, #tpu.memory_space<vmem>>, %arg9: memref<128x128xf32, #tpu.memory_space<vmem>>) attributes {dimension_semantics = [#tpu.dimension_semantics<parallel>], iteration_bounds = array<i64: 2>, scalar_prefetch = 0 : i64, scratch_operands = 0 : i64, tpu.core_type = #tpu.core_type<tc>, window_params = [{transform_indices = @transform_0, window_bounds = array<i64: 128, 128>}, {transform_indices = @transform_1, window_bounds = array<i64: 128, 8>}, {pipeline_mode = #tpu.pipeline_mode<synchronous>, transform_indices = @transform_2, window_bounds = array<i64: 64, 128>}, {pipeline_mode = #tpu.pipeline_mode<synchronous>, transform_indices = @transform_3, window_bounds = array<i64: 64, 128>}, {pipeline_mode = #tpu.pipeline_mode<synchronous>, transform_indices = @transform_4, window_bounds = array<i64: 128, 128>}, {pipeline_mode = #tpu.pipeline_mode<synchronous>, transform_indices = @transform_5, window_bounds = array<i64: 1, 128>}, {pipeline_mode = #tpu.pipeline_mode<synchronous>, transform_indices = @transform_6, window_bounds = array<i64: 128, 128>}, {pipeline_mode = #tpu.pipeline_mode<synchronous>, transform_indices = @transform_7, window_bounds = array<i64: 1, 128>}, {transform_indices = @transform_8, window_bounds = array<i64: 128, 128>}]} {
    %c0 = arith.constant 0 : index
    %c0_0 = arith.constant 0 : index
    %0 = vector.load %arg1[%c0, %c0_0] : memref<128x128xf32, #tpu.memory_space<vmem>>, vector<128x128xf32>
    %1 = arith.truncf %0 : vector<128x128xf32> to vector<128x128xbf16>
    %c0_1 = arith.constant 0 : index
    %c0_2 = arith.constant 0 : index
    %2 = vector.load %arg5[%c0_1, %c0_2] : memref<128x128xbf16, #tpu.memory_space<vmem>>, vector<128x128xbf16>
    %cst = arith.constant dense<0.000000e+00> : vector<128x128xf32>
    %3 = tpu.matmul %1, %2, %cst {dimension_numbers = #tpu.dot_dimension_numbers<[1], [0], [0], [1], [0, 0, 1, 1], [], []>} : vector<128x128xbf16>, vector<128x128xbf16>, vector<128x128xf32> -> vector<128x128xf32>
    %c0_3 = arith.constant 0 : index
    %c0_4 = arith.constant 0 : index
    %4 = vector.load %arg6[%c0_3, %c0_4] : memref<1x128xf32, #tpu.memory_space<vmem>>, vector<1x128xf32>
    %5 = vector.broadcast %4 : vector<1x128xf32> to vector<128x128xf32>
    %6 = arith.addf %3, %5 : vector<128x128xf32>
    %7 = arith.truncf %6 : vector<128x128xf32> to vector<128x128xbf16>
    %c0_5 = arith.constant 0 : index
    %c0_6 = arith.constant 0 : index
    %8 = vector.load %arg3[%c0_5, %c0_6] : memref<64x128xbf16, #tpu.memory_space<vmem>>, vector<64x128xbf16>
    %c0_7 = arith.constant 0 : index
    %c0_8 = arith.constant 0 : index
    %9 = vector.load %arg7[%c0_7, %c0_8] : memref<128x128xbf16, #tpu.memory_space<vmem>>, vector<128x128xbf16>
    %cst_9 = arith.constant dense<0.000000e+00> : vector<64x128xf32>
    %10 = tpu.matmul %8, %9, %cst_9 {dimension_numbers = #tpu.dot_dimension_numbers<[1], [0], [0], [1], [0, 0, 1, 1], [], []>} : vector<64x128xbf16>, vector<128x128xbf16>, vector<64x128xf32> -> vector<64x128xf32>
    %c0_10 = arith.constant 0 : index
    %c0_11 = arith.constant 0 : index
    %11 = vector.load %arg8[%c0_10, %c0_11] : memref<1x128xf32, #tpu.memory_space<vmem>>, vector<1x128xf32>
    %12 = vector.broadcast %11 : vector<1x128xf32> to vector<64x128xf32>
    %13 = arith.addf %10, %12 : vector<64x128xf32>
    %14 = arith.truncf %13 : vector<64x128xf32> to vector<64x128xbf16>
    %15 = tpu.transpose %14, [1, 0] : vector<64x128xbf16> -> vector<128x64xbf16>
    %cst_12 = arith.constant dense<0.000000e+00> : vector<128x64xf32>
    %16 = tpu.matmul %7, %15, %cst_12 {dimension_numbers = #tpu.dot_dimension_numbers<[1], [0], [0], [1], [0, 0, 1, 1], [], []>} : vector<128x128xbf16>, vector<128x64xbf16>, vector<128x64xf32> -> vector<128x64xf32>
    %17 = tpu.iota {dimensions = array<i32: 1>} : vector<128x64xi32>
    %c0_13 = arith.constant 0 : index
    %c0_14 = arith.constant 0 : index
    %18 = vector.load %arg2[%c0_13, %c0_14] : memref<128x8xi32, #tpu.memory_space<vmem>>, vector<128x8xi32>
    %19 = vector.extract_strided_slice %18 {offsets = [0, 0], sizes = [128, 1], strides = [1, 1]} : vector<128x8xi32> to vector<128x1xi32>
    %20 = vector.broadcast %19 : vector<128x1xi32> to vector<128x64xi32>
    %21 = arith.cmpi eq, %20, %17 : vector<128x64xi32>
    %22 = vector.extract_strided_slice %18 {offsets = [0, 1], sizes = [128, 1], strides = [1, 1]} : vector<128x8xi32> to vector<128x1xi32>
    %23 = vector.broadcast %22 : vector<128x1xi32> to vector<128x64xi32>
    %24 = arith.cmpi eq, %23, %17 : vector<128x64xi32>
    %25 = arith.ori %21, %24 : vector<128x64xi1>
    %26 = vector.extract_strided_slice %18 {offsets = [0, 2], sizes = [128, 1], strides = [1, 1]} : vector<128x8xi32> to vector<128x1xi32>
    %27 = vector.broadcast %26 : vector<128x1xi32> to vector<128x64xi32>
    %28 = arith.cmpi eq, %27, %17 : vector<128x64xi32>
    %29 = arith.ori %25, %28 : vector<128x64xi1>
    %30 = vector.extract_strided_slice %18 {offsets = [0, 3], sizes = [128, 1], strides = [1, 1]} : vector<128x8xi32> to vector<128x1xi32>
    %31 = vector.broadcast %30 : vector<128x1xi32> to vector<128x64xi32>
    %32 = arith.cmpi eq, %31, %17 : vector<128x64xi32>
    %33 = arith.ori %29, %32 : vector<128x64xi1>
    %34 = vector.extract_strided_slice %18 {offsets = [0, 4], sizes = [128, 1], strides = [1, 1]} : vector<128x8xi32> to vector<128x1xi32>
    %35 = vector.broadcast %34 : vector<128x1xi32> to vector<128x64xi32>
    %36 = arith.cmpi eq, %35, %17 : vector<128x64xi32>
    %37 = arith.ori %33, %36 : vector<128x64xi1>
    %38 = vector.extract_strided_slice %18 {offsets = [0, 5], sizes = [128, 1], strides = [1, 1]} : vector<128x8xi32> to vector<128x1xi32>
    %39 = vector.broadcast %38 : vector<128x1xi32> to vector<128x64xi32>
    %40 = arith.cmpi eq, %39, %17 : vector<128x64xi32>
    %41 = arith.ori %37, %40 : vector<128x64xi1>
    %42 = vector.extract_strided_slice %18 {offsets = [0, 6], sizes = [128, 1], strides = [1, 1]} : vector<128x8xi32> to vector<128x1xi32>
    %43 = vector.broadcast %42 : vector<128x1xi32> to vector<128x64xi32>
    %44 = arith.cmpi eq, %43, %17 : vector<128x64xi32>
    %45 = arith.ori %41, %44 : vector<128x64xi1>
    %46 = vector.extract_strided_slice %18 {offsets = [0, 7], sizes = [128, 1], strides = [1, 1]} : vector<128x8xi32> to vector<128x1xi32>
    %47 = vector.broadcast %46 : vector<128x1xi32> to vector<128x64xi32>
    %48 = arith.cmpi eq, %47, %17 : vector<128x64xi32>
    %49 = arith.ori %45, %48 : vector<128x64xi1>
    %cst_15 = arith.constant 0xFF800000 : f32
    %50 = vector.broadcast %cst_15 : f32 to vector<128x64xf32>
    %51 = arith.select %49, %16, %50 : vector<128x64xi1>, vector<128x64xf32>
    %cst_16 = arith.constant dense<0xFF800000> : vector<128xf32>
    %52 = vector.multi_reduction <maximumf>, %51, %cst_16 [1] : vector<128x64xf32> to vector<128xf32>
    %53 = vector.shape_cast %52 : vector<128xf32> to vector<128x1xf32>
    %54 = vector.broadcast %53 : vector<128x1xf32> to vector<128x64xf32>
    %55 = arith.subf %51, %54 : vector<128x64xf32>
    %56 = math.exp %55 : vector<128x64xf32>
    %cst_17 = arith.constant dense<0.000000e+00> : vector<128xf32>
    %57 = vector.multi_reduction <add>, %56, %cst_17 [1] : vector<128x64xf32> to vector<128xf32>
    %58 = vector.shape_cast %57 : vector<128xf32> to vector<128x1xf32>
    %59 = tpu.reciprocal %58 {approx = true} : vector<128x1xf32> -> vector<128x1xf32>
    %60 = vector.broadcast %59 : vector<128x1xf32> to vector<128x64xf32>
    %61 = arith.mulf %56, %60 : vector<128x64xf32>
    %62 = arith.truncf %61 : vector<128x64xf32> to vector<128x64xbf16>
    %c0_18 = arith.constant 0 : index
    %c0_19 = arith.constant 0 : index
    %63 = vector.load %arg4[%c0_18, %c0_19] : memref<64x128xbf16, #tpu.memory_space<vmem>>, vector<64x128xbf16>
    %cst_20 = arith.constant dense<0.000000e+00> : vector<128x128xf32>
    %64 = tpu.matmul %62, %63, %cst_20 {dimension_numbers = #tpu.dot_dimension_numbers<[1], [0], [0], [1], [0, 0, 1, 1], [], []>} : vector<128x64xbf16>, vector<64x128xbf16>, vector<128x128xf32> -> vector<128x128xf32>
    %cst_21 = arith.constant 5.000000e-01 : f32
    %65 = vector.broadcast %cst_21 : f32 to vector<128x128xf32>
    %66 = arith.mulf %65, %0 : vector<128x128xf32>
    %cst_22 = arith.constant 5.000000e-01 : f32
    %67 = vector.broadcast %cst_22 : f32 to vector<128x128xf32>
    %68 = arith.mulf %67, %64 : vector<128x128xf32>
    %69 = arith.addf %66, %68 : vector<128x128xf32>
    %c0_23 = arith.constant 0 : index
    %c0_24 = arith.constant 0 : index
    %70 = vector.load %arg9[%c0_23, %c0_24] : memref<128x128xf32, #tpu.memory_space<vmem>>, vector<128x128xf32>
    tpu.vector_store %arg9[%c0_23, %c0_24], %69 {strides = array<i32>} : memref<128x128xf32, #tpu.memory_space<vmem>>, vector<128x128xf32>,
    return
  }
  func.func @transform_0(%arg0: i32) -> (i32, i32) {
    %c0_i32 = arith.constant 0 : i32
    %c0_i32_0 = arith.constant 0 : i32
    return %arg0, %c0_i32 : i32, i32
  }
  func.func @transform_1(%arg0: i32) -> (i32, i32) {
    %c0_i32 = arith.constant 0 : i32
    %c0_i32_0 = arith.constant 0 : i32
    return %arg0, %c0_i32 : i32, i32
  }
  func.func @transform_2(%arg0: i32) -> (i32, i32) {
    %c0_i32 = arith.constant 0 : i32
    %c0_i32_0 = arith.constant 0 : i32
    %c0_i32_1 = arith.constant 0 : i32
    return %c0_i32, %c0_i32_0 : i32, i32
  }
  func.func @transform_3(%arg0: i32) -> (i32, i32) {
    %c0_i32 = arith.constant 0 : i32
    %c0_i32_0 = arith.constant 0 : i32
    %c0_i32_1 = arith.constant 0 : i32
    return %c0_i32, %c0_i32_0 : i32, i32
  }
  func.func @transform_4(%arg0: i32) -> (i32, i32) {
    %c0_i32 = arith.constant 0 : i32
    %c0_i32_0 = arith.constant 0 : i32
    %c0_i32_1 = arith.constant 0 : i32
    return %c0_i32, %c0_i32_0 : i32, i32
  }
  func.func @transform_5(%arg0: i32) -> (i32, i32) {
    %c0_i32 = arith.constant 0 : i32
    %c0_i32_0 = arith.constant 0 : i32
    %c0_i32_1 = arith.constant 0 : i32
    return %c0_i32, %c0_i32_0 : i32, i32
  }
  func.func @transform_6(%arg0: i32) -> (i32, i32) {
    %c0_i32 = arith.constant 0 : i32
    %c0_i32_0 = arith.constant 0 : i32
    %c0_i32_1 = arith.constant 0 : i32
    return %c0_i32, %c0_i32_0 : i32, i32
  }
  func.func @transform_7(%arg0: i32) -> (i32, i32) {
    %c0_i32 = arith.constant 0 : i32
    %c0_i32_0 = arith.constant 0 : i32
    %c0_i32_1 = arith.constant 0 : i32
    return %c0_i32, %c0_i32_0 : i32, i32
  }
  func.func @transform_8(%arg0: i32) -> (i32, i32) {
    %c0_i32 = arith.constant 0 : i32
    %c0_i32_0 = arith.constant 0 : i32
    return %arg0, %c0_i32 : i32, i32
  }
}

</mosaic_0001>

<llo_original>
// kernel: tpu_custom_call.1
$region0: #{tpu_custom_call.1}
  #allocation0 [shape = 'u32[]', space=smem, size = 0x4, offset = 0x4, fixed_abs, tag = 'smem constant byte address 0x4 - core index']
  #allocation1 [shape = 'u32[144,128]{1,0:T(1,128)}', space=vmem, size = 0x12000, scoped, tag = 'internal scratch']
  %s0 = inlined_call_operand.vmem [shape: f32[256,128], index: 0, kind: input, shape index: {}]
  %s1 = inlined_call_operand.vmem [shape: s32[256,8], index: 1, kind: input, shape index: {}]
  %s2 = inlined_call_operand.hbm [shape: bf16[64,128], index: 2, kind: input, shape index: {}]
  %s3 = inlined_call_operand.hbm [shape: bf16[64,128], index: 3, kind: input, shape index: {}]
  %s4 = inlined_call_operand.hbm [shape: bf16[128,128], index: 4, kind: input, shape index: {}]
  %s5 = inlined_call_operand.vmem [shape: f32[1,128], index: 5, kind: input, shape index: {}]
  %s6 = inlined_call_operand.hbm [shape: bf16[128,128], index: 6, kind: input, shape index: {}]
  %s7 = inlined_call_operand.vmem [shape: f32[1,128], index: 7, kind: input, shape index: {}]
  %s8 = inlined_call_operand.hbm [shape: f32[256,128], index: 8, kind: output, shape index: {}]
  %s9 = sld [smem:[#allocation0]]
  $region81: #{tpu_custom_call.1} parent=0
    _
  %s11 = ssub.s32 1, %s9
  %s12 = scalar_select 0, %s11, %s9
  $region1: #{tpu_custom_call.1} parent=0
    #allocation2 [shape = 'u8[16384]{0}', space=vmem, size = 0x4000, scoped, tag = 'input window, operand 2, single buffered']
    #allocation3 [shape = 's32[2]{0}', space=sflag, size = 0x8, scoped, tag = 'scoped memory for tpu_custom_call.1']
    #allocation4 [shape = 's32[2]{0}', space=sflag, size = 0x8, scoped, tag = 'scoped memory for tpu_custom_call.1']
    #allocation5 [shape = 'u8[16384]{0}', space=vmem, size = 0x4000, scoped, tag = 'input window, operand 3, single buffered']
    #allocation6 [shape = 's32[1]{0}', space=sflag, size = 0x4, scoped, tag = 'scoped memory for tpu_custom_call.1']
    #allocation7 [shape = 'u8[32768]{0}', space=vmem, size = 0x8000, scoped, tag = 'input window, operand 4, single buffered']
    #allocation8 [shape = 'u8[32768]{0}', space=vmem, size = 0x8000, scoped, tag = 'input window, operand 6, single buffered']
    #allocation9 [shape = 's32[1]{0}', space=sflag, size = 0x4, scoped, tag = 'scoped memory for tpu_custom_call.1']
    #allocation10 [shape = 'u8[131072]{0}', space=vmem, size = 0x20000, scoped, tag = 'output window, operand 0']
    %13 = vsyncpa [#allocation3], 0
    %14 = vsyncpa [#allocation6], 0
    %15 = vsyncpa [#allocation9], 0
    %16 = vsyncpa [#allocation4], 0
    %s17 = scalar_lea.sflag [#allocation4], 1
    %18 = vsyncpa %s17, 0
    loop: start=0, step=1, limit=4
    $region2: #{tpu_custom_call.1} parent=1 // loop_pre_header
      _
    $region3: #{tpu_custom_call.1} parent=1 // loop_header
      %s20 = sphi 0, %s24
      %p21 = scmp.ge.s32.totalorder %s20, 4
      %s30 = sphi 0, %s32
      %s33 = sphi 0, %s30
      %s34 = sphi 0, %s33
      %s50 = sphi 0, %s34
      %s56 = sphi 0, %s58
      %s59 = sphi 0, %s56
      %s60 = sphi 0, %s59
      %s76 = sphi 0, %s60
      %s80 = sphi 0, %s80
      %s82 = sphi 0, %s80
      %s83 = sphi 0, %s82
      %s97 = sphi 0, %s83
      %s101 = sphi 0, %s101
      %s103 = sphi 0, %s101
      %s104 = sphi 0, %s103
      %s118 = sphi 0, %s104
      %s122 = sphi 0, %s122
      %s124 = sphi 0, %s122
      %s125 = sphi 0, %s124
      %s139 = sphi 0, %s125
      %s143 = sphi 0, %s143
      %s145 = sphi 0, %s143
      %s146 = sphi 0, %s145
      %s160 = sphi 0, %s146
      %s164 = sphi 0, %s164
      %s166 = sphi 0, %s164
      %s167 = sphi 0, %s166
      %s181 = sphi 0, %s167
      %s185 = sphi 0, %s185
      %s187 = sphi 0, %s185
      %s188 = sphi 0, %s187
      %s202 = sphi 0, %s188
      %s208 = sphi 0, %s210
      %s211 = sphi 0, %s208
      %s212 = sphi 0, %s211
      %s228 = sphi 0, %s212
    $region4: #{tpu_custom_call.1} parent=1 // loop_header_branch
      %23 = sbr.rel (%p21) target = $region8
    $region5: #{tpu_custom_call.1} parent=1 // loop_body
      %s25 = ssub.s32 %s20, 1
      %s26 = ssub.s32 %s20, 2
      %s27 = sadd.s32 %s20, 1
      %s28 = ssub.s32 %s20, %s27
      %p29 = scmp.eq.s32.totalorder %s28, 0
      %s31 = sadd.s32 %s30, 1
      %s32 = scalar_select %p29, %s30, %s31
      %p35 = pneg %p29
      %p36 = scmp.eq.s32.totalorder %s20, 1
      %p37 = por %p35, %p36
      %p38 = scmp.ne.s32.totalorder %s30, %s33
      %p39 = scmp.eq.s32.totalorder %s20, 0
      %p40 = por %p38, %p39
      %p41 = scmp.ne.s32.totalorder %s30, %s33
      %p42 = scmp.eq.s32.totalorder %s25, 1
      %p43 = por %p41, %p42
      %p44 = scmp.ne.s32.totalorder %s33, %s34
      %p45 = scmp.eq.s32.totalorder %s25, 0
      %p46 = por %p44, %p45
      %p47 = scmp.ne.s32.totalorder %s33, %s34
      %p48 = scmp.eq.s32.totalorder %s26, 1
      %p49 = por %p47, %p48
      %p51 = scmp.ne.s32.totalorder %s34, %s50
      %p52 = scmp.eq.s32.totalorder %s26, 0
      %p53 = por %p51, %p52
      %s54 = ssub.s32 %s20, %s27
      %p55 = scmp.eq.s32.totalorder %s54, 0
      %s57 = sadd.s32 %s56, 1
      %s58 = scalar_select %p55, %s56, %s57
      %p61 = pneg %p55
      %p62 = scmp.eq.s32.totalorder %s20, 1
      %p63 = por %p61, %p62
      %p64 = scmp.ne.s32.totalorder %s56, %s59
      %p65 = scmp.eq.s32.totalorder %s20, 0
      %p66 = por %p64, %p65
      %p67 = scmp.ne.s32.totalorder %s56, %s59
      %p68 = scmp.eq.s32.totalorder %s25, 1
      %p69 = por %p67, %p68
      %p70 = scmp.ne.s32.totalorder %s59, %s60
      %p71 = scmp.eq.s32.totalorder %s25, 0
      %p72 = por %p70, %p71
      %p73 = scmp.ne.s32.totalorder %s59, %s60
      %p74 = scmp.eq.s32.totalorder %s26, 1
      %p75 = por %p73, %p74
      %p77 = scmp.ne.s32.totalorder %s60, %s76
      %p78 = scmp.eq.s32.totalorder %s26, 0
      %p79 = por %p77, %p78
      %s81 = sadd.s32 %s80, 1
      %p84 = scmp.eq.s32.totalorder %s20, 1
      %p85 = scmp.ne.s32.totalorder %s80, %s82
      %p86 = scmp.eq.s32.totalorder %s20, 0
      %p87 = por %p85, %p86
      %p88 = scmp.ne.s32.totalorder %s80, %s82
      %p89 = scmp.eq.s32.totalorder %s25, 1
      %p90 = por %p88, %p89
      %p91 = scmp.ne.s32.totalorder %s82, %s83
      %p92 = scmp.eq.s32.totalorder %s25, 0
      %p93 = por %p91, %p92
      %p94 = scmp.ne.s32.totalorder %s82, %s83
      %p95 = scmp.eq.s32.totalorder %s26, 1
      %p96 = por %p94, %p95
      %p98 = scmp.ne.s32.totalorder %s83, %s97
      %p99 = scmp.eq.s32.totalorder %s26, 0
      %p100 = por %p98, %p99
      %s102 = sadd.s32 %s101, 1
      %p105 = scmp.eq.s32.totalorder %s20, 1
      %p106 = scmp.ne.s32.totalorder %s101, %s103
      %p107 = scmp.eq.s32.totalorder %s20, 0
      %p108 = por %p106, %p107
      %p109 = scmp.ne.s32.totalorder %s101, %s103
      %p110 = scmp.eq.s32.totalorder %s25, 1
      %p111 = por %p109, %p110
      %p112 = scmp.ne.s32.totalorder %s103, %s104
      %p113 = scmp.eq.s32.totalorder %s25, 0
      %p114 = por %p112, %p113
      %p115 = scmp.ne.s32.totalorder %s103, %s104
      %p116 = scmp.eq.s32.totalorder %s26, 1
      %p117 = por %p115, %p116
      %p119 = scmp.ne.s32.totalorder %s104, %s118
      %p120 = scmp.eq.s32.totalorder %s26, 0
      %p121 = por %p119, %p120
      %s123 = sadd.s32 %s122, 1
      %p126 = scmp.eq.s32.totalorder %s20, 1
      %p127 = scmp.ne.s32.totalorder %s122, %s124
      %p128 = scmp.eq.s32.totalorder %s20, 0
      %p129 = por %p127, %p128
      %p130 = scmp.ne.s32.totalorder %s122, %s124
      %p131 = scmp.eq.s32.totalorder %s25, 1
      %p132 = por %p130, %p131
      %p133 = scmp.ne.s32.totalorder %s124, %s125
      %p134 = scmp.eq.s32.totalorder %s25, 0
      %p135 = por %p133, %p134
      %p136 = scmp.ne.s32.totalorder %s124, %s125
      %p137 = scmp.eq.s32.totalorder %s26, 1
      %p138 = por %p136, %p137
      %p140 = scmp.ne.s32.totalorder %s125, %s139
      %p141 = scmp.eq.s32.totalorder %s26, 0
      %p142 = por %p140, %p141
      %s144 = sadd.s32 %s143, 1
      %p147 = scmp.eq.s32.totalorder %s20, 1
      %p148 = scmp.ne.s32.totalorder %s143, %s145
      %p149 = scmp.eq.s32.totalorder %s20, 0
      %p150 = por %p148, %p149
      %p151 = scmp.ne.s32.totalorder %s143, %s145
      %p152 = scmp.eq.s32.totalorder %s25, 1
      %p153 = por %p151, %p152
      %p154 = scmp.ne.s32.totalorder %s145, %s146
      %p155 = scmp.eq.s32.totalorder %s25, 0
      %p156 = por %p154, %p155
      %p157 = scmp.ne.s32.totalorder %s145, %s146
      %p158 = scmp.eq.s32.totalorder %s26, 1
      %p159 = por %p157, %p158
      %p161 = scmp.ne.s32.totalorder %s146, %s160
      %p162 = scmp.eq.s32.totalorder %s26, 0
      %p163 = por %p161, %p162
      %s165 = sadd.s32 %s164, 1
      %p168 = scmp.eq.s32.totalorder %s20, 1
      %p169 = scmp.ne.s32.totalorder %s164, %s166
      %p170 = scmp.eq.s32.totalorder %s20, 0
      %p171 = por %p169, %p170
      %p172 = scmp.ne.s32.totalorder %s164, %s166
      %p173 = scmp.eq.s32.totalorder %s25, 1
      %p174 = por %p172, %p173
      %p175 = scmp.ne.s32.totalorder %s166, %s167
      %p176 = scmp.eq.s32.totalorder %s25, 0
      %p177 = por %p175, %p176
      %p178 = scmp.ne.s32.totalorder %s166, %s167
      %p179 = scmp.eq.s32.totalorder %s26, 1
      %p180 = por %p178, %p179
      %p182 = scmp.ne.s32.totalorder %s167, %s181
      %p183 = scmp.eq.s32.totalorder %s26, 0
      %p184 = por %p182, %p183
      %s186 = sadd.s32 %s185, 1
      %p189 = scmp.eq.s32.totalorder %s20, 1
      %p190 = scmp.ne.s32.totalorder %s185, %s187
      %p191 = scmp.eq.s32.totalorder %s20, 0
      %p192 = por %p190, %p191
      %p193 = scmp.ne.s32.totalorder %s185, %s187
      %p194 = scmp.eq.s32.totalorder %s25, 1
      %p195 = por %p193, %p194
      %p196 = scmp.ne.s32.totalorder %s187, %s188
      %p197 = scmp.eq.s32.totalorder %s25, 0
      %p198 = por %p196, %p197
      %p199 = scmp.ne.s32.totalorder %s187, %s188
      %p200 = scmp.eq.s32.totalorder %s26, 1
      %p201 = por %p199, %p200
      %p203 = scmp.ne.s32.totalorder %s188, %s202
      %p204 = scmp.eq.s32.totalorder %s26, 0
      %p205 = por %p203, %p204
      %s206 = ssub.s32 %s20, %s27
      %p207 = scmp.eq.s32.totalorder %s206, 0
      %s209 = sadd.s32 %s208, 1
      %s210 = scalar_select %p207, %s208, %s209
      %p213 = pneg %p207
      %p214 = scmp.eq.s32.totalorder %s20, 1
      %p215 = por %p213, %p214
      %p216 = scmp.ne.s32.totalorder %s208, %s211
      %p217 = scmp.eq.s32.totalorder %s20, 0
      %p218 = por %p216, %p217
      %p219 = scmp.ne.s32.totalorder %s208, %s211
      %p220 = scmp.eq.s32.totalorder %s25, 1
      %p221 = por %p219, %p220
      %p222 = scmp.ne.s32.totalorder %s211, %s212
      %p223 = scmp.eq.s32.totalorder %s25, 0
      %p224 = por %p222, %p223
      %p225 = scmp.ne.s32.totalorder %s211, %s212
      %p226 = scmp.eq.s32.totalorder %s26, 1
      %p227 = por %p225, %p226
      %p229 = scmp.ne.s32.totalorder %s212, %s228
      %p230 = scmp.eq.s32.totalorder %s26, 0
      %p231 = por %p229, %p230
      %p232 = scmp.le.s32.totalorder 1, %s20
      %p233 = scmp.lt.s32.totalorder %s20, 3
      %p234 = pnand %p232, %p233
      %p235 = pneg %p234
      // Predicated region
      $region9: #{tpu_custom_call.1} parent=5 // pred_check
        _
      $region10: #{tpu_custom_call.1} parent=5 // pred_check_branch
        %237 = sbr.rel (%p234) target = $region12
      $region11: #{tpu_custom_call.1} parent=5 // pred_region
        %s238 = ssub.s32 %s20, 1
        // Predicated region
        $region13: #{tpu_custom_call.1} parent=11 // pred_check
          %p239 = pneg %p93
        $region14: #{tpu_custom_call.1} parent=11 // pred_check_branch
          %241 = sbr.rel (%p239) target = $region16
        $region15: #{tpu_custom_call.1} parent=11 // pred_region
          %s243 = ssub.s32 512, 512
          %244 = vsyncadd [#allocation3], %s243
          %s245 = sshll.u32 [#allocation2], 4
          %s246 = int_to_ptr.vmem [resolvable:$true] %s245
          %251 = dma.hbm_to_vmem [thread:$0]  %s2, 512, %s246, [#allocation3], 64, 64, 4
        $region16: #{tpu_custom_call.1} parent=11 // pred_fallthru
          _
        // Predicated region
        $region17: #{tpu_custom_call.1} parent=11 // pred_check
          %p252 = pneg %p114
        $region18: #{tpu_custom_call.1} parent=11 // pred_check_branch
          %254 = sbr.rel (%p252) target = $region20
        $region19: #{tpu_custom_call.1} parent=11 // pred_region
          %s256 = ssub.s32 512, 512
          %257 = vsyncadd [#allocation6], %s256
          %s258 = sshll.u32 [#allocation5], 4
          %s259 = int_to_ptr.vmem [resolvable:$true] %s258
          %264 = dma.hbm_to_vmem [thread:$0]  %s3, 512, %s259, [#allocation6], 64, 64, 4
        $region20: #{tpu_custom_call.1} parent=11 // pred_fallthru
          _
        // Predicated region
        $region21: #{tpu_custom_call.1} parent=11 // pred_check
          %p265 = pneg %p135
        $region22: #{tpu_custom_call.1} parent=11 // pred_check_branch
          %267 = sbr.rel (%p265) target = $region24
        $region23: #{tpu_custom_call.1} parent=11 // pred_region
          %s269 = ssub.s32 1024, 1024
          %270 = vsyncadd [#allocation6], %s269
          %s271 = sshll.u32 [#allocation7], 4
          %s272 = int_to_ptr.vmem [resolvable:$true] %s271
          %277 = dma.hbm_to_vmem [thread:$0]  %s4, 1024, %s272, [#allocation6], 64, 64, 4
        $region24: #{tpu_custom_call.1} parent=11 // pred_fallthru
          _
        // Predicated region
        $region25: #{tpu_custom_call.1} parent=11 // pred_check
          %p278 = pneg %p156
        $region26: #{tpu_custom_call.1} parent=11 // pred_check_branch
          %280 = sbr.rel (%p278) target = $region28
        $region27: #{tpu_custom_call.1} parent=11 // pred_region
          _
        $region28: #{tpu_custom_call.1} parent=11 // pred_fallthru
          _
        // Predicated region
        $region29: #{tpu_custom_call.1} parent=11 // pred_check
          %p281 = pneg %p177
        $region30: #{tpu_custom_call.1} parent=11 // pred_check_branch
          %283 = sbr.rel (%p281) target = $region32
        $region31: #{tpu_custom_call.1} parent=11 // pred_region
          %s285 = ssub.s32 1024, 1024
          %286 = vsyncadd [#allocation9], %s285
          %s287 = sshll.u32 [#allocation8], 4
          %s288 = int_to_ptr.vmem [resolvable:$true] %s287
          %293 = dma.hbm_to_vmem [thread:$0]  %s6, 1024, %s288, [#allocation9], 64, 64, 4
        $region32: #{tpu_custom_call.1} parent=11 // pred_fallthru
          _
        // Predicated region
        $region33: #{tpu_custom_call.1} parent=11 // pred_check
          %p294 = pneg %p198
        $region34: #{tpu_custom_call.1} parent=11 // pred_check_branch
          %296 = sbr.rel (%p294) target = $region36
        $region35: #{tpu_custom_call.1} parent=11 // pred_region
          _
        $region36: #{tpu_custom_call.1} parent=11 // pred_fallthru
          _
      $region12: #{tpu_custom_call.1} parent=5 // pred_fallthru
        _
      %p297 = scmp.lt.s32.totalorder %s20, 2
      // Predicated region
      $region37: #{tpu_custom_call.1} parent=5 // pred_check
        %p298 = pneg %p297
      $region38: #{tpu_custom_call.1} parent=5 // pred_check_branch
        %300 = sbr.rel (%p298) target = $region40
      $region39: #{tpu_custom_call.1} parent=5 // pred_region
        // Predicated region
        $region41: #{tpu_custom_call.1} parent=39 // pred_check
          %p301 = pneg %p40
        $region42: #{tpu_custom_call.1} parent=39 // pred_check_branch
          %303 = sbr.rel (%p301) target = $region44
        $region43: #{tpu_custom_call.1} parent=39 // pred_region
          %s304 = smul.u32 16, %s20
          %p305 = scmp.lt.s32.totalorder %s304, 31
          %s306 = scalar_select %p305, %s304, 31
          %s307 = smul.addr %s306, 8
          %s308 = scalar_lea.vmem %s0, %s307
          %s309 = smul.u32 16, %s20
        $region44: #{tpu_custom_call.1} parent=39 // pred_fallthru
          _
        // Predicated region
        $region45: #{tpu_custom_call.1} parent=39 // pred_check
          %p310 = pneg %p66
        $region46: #{tpu_custom_call.1} parent=39 // pred_check_branch
          %312 = sbr.rel (%p310) target = $region48
        $region47: #{tpu_custom_call.1} parent=39 // pred_region
          %s313 = smul.u32 16, %s20
          %p314 = scmp.lt.s32.totalorder %s313, 31
          %s315 = scalar_select %p314, %s313, 31
          %s316 = smul.addr %s315, 8
          %s317 = scalar_lea.vmem %s1, %s316
          %s318 = smul.u32 16, %s20
        $region48: #{tpu_custom_call.1} parent=39 // pred_fallthru
          _
      $region40: #{tpu_custom_call.1} parent=5 // pred_fallthru
        _
      %p319 = scmp.le.s32.totalorder 1, %s20
      %p320 = scmp.lt.s32.totalorder %s20, 3
      %p321 = pnand %p319, %p320
      %p322 = pneg %p321
      // Predicated region
      $region49: #{tpu_custom_call.1} parent=5 // pred_check
        _
      $region50: #{tpu_custom_call.1} parent=5 // pred_check_branch
        %324 = sbr.rel (%p321) target = $region52
      $region51: #{tpu_custom_call.1} parent=5 // pred_region
        %s325 = ssub.s32 %s20, 1
        // Predicated region
        $region53: #{tpu_custom_call.1} parent=51 // pred_check
          %p326 = pneg %p93
        $region54: #{tpu_custom_call.1} parent=51 // pred_check_branch
          %328 = sbr.rel (%p326) target = $region56
        $region55: #{tpu_custom_call.1} parent=51 // pred_region
          %329 = dma.done [#allocation3], 512
        $region56: #{tpu_custom_call.1} parent=51 // pred_fallthru
          _
        // Predicated region
        $region57: #{tpu_custom_call.1} parent=51 // pred_check
          %p330 = pneg %p114
        $region58: #{tpu_custom_call.1} parent=51 // pred_check_branch
          %332 = sbr.rel (%p330) target = $region60
        $region59: #{tpu_custom_call.1} parent=51 // pred_region
          %333 = dma.done [#allocation6], 512
        $region60: #{tpu_custom_call.1} parent=51 // pred_fallthru
          _
        // Predicated region
        $region61: #{tpu_custom_call.1} parent=51 // pred_check
          %p334 = pneg %p135
        $region62: #{tpu_custom_call.1} parent=51 // pred_check_branch
          %336 = sbr.rel (%p334) target = $region64
        $region63: #{tpu_custom_call.1} parent=51 // pred_region
          %337 = dma.done [#allocation6], 1024
        $region64: #{tpu_custom_call.1} parent=51 // pred_fallthru
          _
        // Predicated region
        $region65: #{tpu_custom_call.1} parent=51 // pred_check
          %p338 = pneg %p177
        $region66: #{tpu_custom_call.1} parent=51 // pred_check_branch
          %340 = sbr.rel (%p338) target = $region68
        $region67: #{tpu_custom_call.1} parent=51 // pred_region
          %341 = dma.done [#allocation9], 1024
        $region68: #{tpu_custom_call.1} parent=51 // pred_fallthru
          _
        %s342 = smul.u32 16, %s25
        %p343 = scmp.lt.s32.totalorder %s342, 31
        %s344 = scalar_select %p343, %s342, 31
        %s345 = smul.addr %s344, 8
        %s346 = scalar_lea.vmem %s0, %s345
        %p347 = pneg %p46
        %p348 = pneg %p43
        %s349 = smul.u32 16, %s25
        %p350 = scmp.lt.s32.totalorder %s349, 31
        %s351 = scalar_select %p350, %s349, 31
        %s352 = smul.addr %s351, 8
        %s353 = scalar_lea.vmem %s1, %s352
        %p354 = pneg %p72
        %p355 = pneg %p69
        %p356 = pneg %p93
        %p357 = pneg %p90
        %p358 = pneg %p114
        %p359 = pneg %p111
        %p360 = pneg %p135
        %p361 = pneg %p132
        %p362 = pneg %p156
        %p363 = pneg %p153
        %p364 = pneg %p177
        %p365 = pneg %p174
        %p366 = pneg %p198
        %p367 = pneg %p195
        %p368 = pneg %p224
        %p369 = pneg %p221
        %s370 = sand.u32 %s211, 1
        %s371 = scalar_lea.sflag [#allocation4], %s370
        %s372 = sand.u32 %s211, 1
        %s373 = smul.addr %s372, 128
        %s374 = scalar_lea.vmem [#allocation10], %s373
        %s375 = smul.u32 16, %s25
        %p376 = scmp.lt.s32.totalorder %s375, 31
        %s377 = scalar_select %p376, %s375, 31
        %s378 = smul.addr %s377, 8
        %s379 = scalar_lea.vmem %s0, %s378
        %s380 = smul.u32 16, %s25
        %s381 = smul.u32 16, %s25
        %p382 = scmp.lt.s32.totalorder %s381, 31
        %s383 = scalar_select %p382, %s381, 31
        %s384 = smul.addr %s383, 8
        %s385 = scalar_lea.vmem %s1, %s384
        %s386 = smul.u32 16, %s25
        %s387 = smul.u32 16, %s25
        %v389 = vld [vmem:[%s379] sm:$0xff]
        %v390 = vld [vmem:[%s379 + $0x8] sm:$0xff]
        %v391 = vld [vmem:[%s379 + $0x10] sm:$0xff]
        %v392 = vld [vmem:[%s379 + $0x18] sm:$0xff]
        %v393 = vld [vmem:[%s379 + $0x20] sm:$0xff]
        %v394 = vld [vmem:[%s379 + $0x28] sm:$0xff]
        %v395 = vld [vmem:[%s379 + $0x30] sm:$0xff]
        %v396 = vld [vmem:[%s379 + $0x38] sm:$0xff]
        %v397 = vld [vmem:[%s379 + $0x40] sm:$0xff]
        %v398 = vld [vmem:[%s379 + $0x48] sm:$0xff]
        %v399 = vld [vmem:[%s379 + $0x50] sm:$0xff]
        %v400 = vld [vmem:[%s379 + $0x58] sm:$0xff]
        %v401 = vld [vmem:[%s379 + $0x60] sm:$0xff]
        %v402 = vld [vmem:[%s379 + $0x68] sm:$0xff]
        %v403 = vld [vmem:[%s379 + $0x70] sm:$0xff]
        %v404 = vld [vmem:[%s379 + $0x78] sm:$0xff]
        %v405 = vpack.c.bf16 %v390, %v389
        %v406 = vpack.c.bf16 %v392, %v391
        %v407 = vpack.c.bf16 %v394, %v393
        %v408 = vpack.c.bf16 %v396, %v395
        %v409 = vpack.c.bf16 %v398, %v397
        %v410 = vpack.c.bf16 %v400, %v399
        %v411 = vpack.c.bf16 %v402, %v401
        %v412 = vpack.c.bf16 %v404, %v403
        %v413 = vld [vmem:[#allocation7] sm:$0xf]
        %v414 = vld [vmem:[#allocation7 + $0x4] sm:$0xf]
        %v415 = vld [vmem:[#allocation7 + $0x8] sm:$0xf]
        %v416 = vld [vmem:[#allocation7 + $0xc] sm:$0xf]
        %v417 = vld [vmem:[#allocation7 + $0x10] sm:$0xf]
        %v418 = vld [vmem:[#allocation7 + $0x14] sm:$0xf]
        %v419 = vld [vmem:[#allocation7 + $0x18] sm:$0xf]
        %v420 = vld [vmem:[#allocation7 + $0x1c] sm:$0xf]
        %v421 = vld [vmem:[#allocation7 + $0x20] sm:$0xf]
        %v422 = vld [vmem:[#allocation7 + $0x24] sm:$0xf]
        %v423 = vld [vmem:[#allocation7 + $0x28] sm:$0xf]
        %v424 = vld [vmem:[#allocation7 + $0x2c] sm:$0xf]
        %v425 = vld [vmem:[#allocation7 + $0x30] sm:$0xf]
        %v426 = vld [vmem:[#allocation7 + $0x34] sm:$0xf]
        %v427 = vld [vmem:[#allocation7 + $0x38] sm:$0xf]
        %v428 = vld [vmem:[#allocation7 + $0x3c] sm:$0xf]
        %v429 = vld [vmem:[%s5] sm:$0x1]
        %v431 = vlaneseq
        %v432 = vshrl.u32 %v431, 7
        %v433 = vsub.s32 0, %v432
        %v434 = vrot.slane %v429, %v433
        %v452 = vunpack.c.l.b16 %v413
        %v453 = vunpack.c.l.b16 %v414
        %v454 = vunpack.c.l.b16 %v415
        %v455 = vunpack.c.l.b16 %v416
        %v456 = vunpack.c.l.b16 %v417
        %v457 = vunpack.c.l.b16 %v418
        %v458 = vunpack.c.l.b16 %v419
        %v459 = vunpack.c.l.b16 %v420
        %v460 = vunpack.c.l.b16 %v421
        %v461 = vunpack.c.l.b16 %v422
        %v462 = vunpack.c.l.b16 %v423
        %v463 = vunpack.c.l.b16 %v424
        %v464 = vunpack.c.l.b16 %v425
        %v465 = vunpack.c.l.b16 %v426
        %v466 = vunpack.c.l.b16 %v427
        %v467 = vunpack.c.l.b16 %v428
        %v468 = vpack.c.b16 %v453, %v452
        %v469 = vpack.c.b16 %v455, %v454
        %v470 = vpack.c.b16 %v457, %v456
        %v471 = vpack.c.b16 %v459, %v458
        %v472 = vpack.c.b16 %v461, %v460
        %v473 = vpack.c.b16 %v463, %v462
        %v474 = vpack.c.b16 %v465, %v464
        %v475 = vpack.c.b16 %v467, %v466
        %484 = vmatprep.subr.bf16.mxu0 0
        %485 = vmatpush1.bf16.msra.mxu0 %v468
        %486 = vmatprep.subr.bf16.mxu0 0
        %487 = vmatpush1.bf16.msra.mxu0 %v469
        %488 = vmatprep.subr.bf16.mxu0 0
        %489 = vmatpush1.bf16.msra.mxu0 %v470
        %490 = vmatprep.subr.bf16.mxu0 0
        %491 = vmatpush1.bf16.msra.mxu0 %v471
        %492 = vmatprep.subr.bf16.mxu0 0
        %493 = vmatpush1.bf16.msra.mxu0 %v472
        %494 = vmatprep.subr.bf16.mxu0 0
        %495 = vmatpush1.bf16.msra.mxu0 %v473
        %496 = vmatprep.subr.bf16.mxu0 0
        %497 = vmatpush1.bf16.msra.mxu0 %v474
        %498 = vmatprep.subr.bf16.mxu0 0
        %499 = vmatpush1.bf16.msra.mxu0 %v475
        %500 = vmatprep.subr.bf16.mxu0 0
        %501 = vmatpush1.bf16.msra.mxu0 0
        %502 = vmatprep.subr.bf16.mxu0 0
        %503 = vmatpush1.bf16.msra.mxu0 0
        %504 = vmatprep.subr.bf16.mxu0 0
        %505 = vmatpush1.bf16.msra.mxu0 0
        %506 = vmatprep.subr.bf16.mxu0 0
        %507 = vmatpush1.bf16.msra.mxu0 0
        %508 = vmatprep.subr.bf16.mxu0 0
        %509 = vmatpush1.bf16.msra.mxu0 0
        %510 = vmatprep.subr.bf16.mxu0 0
        %511 = vmatpush1.bf16.msra.mxu0 0
        %512 = vmatprep.subr.bf16.mxu0 0
        %513 = vmatpush1.bf16.msra.mxu0 0
        %514 = vmatprep.subr.bf16.mxu0 0
        %515 = vmatpush1.bf16.msra.mxu0 0
        %516 = vmatprep.mubr.bf16.mxu0 0
        %517 = vmatmul.mubr.bf16.gmra.mrb[0].mxu0 %v405
        %v518 = vpop.f32.mrb[0].mxu0
        %v519 = vadd.f32 %v434, %v518
        %v520 = vpop.f32.mrb[0].mxu0
        %v521 = vpop.f32.mrb[0].mxu0
        %v522 = vadd.f32 %v434, %v521
        %v523 = vpop.f32.mrb[0].mxu0
        %524 = vmatprep.mubr.bf16.mxu0 0
        %525 = vmatmul.mubr.bf16.gmra.mrb[0].mxu0 %v406
        %v526 = vpop.f32.mrb[0].mxu0
        %v527 = vadd.f32 %v434, %v526
        %v528 = vpop.f32.mrb[0].mxu0
        %v529 = vpop.f32.mrb[0].mxu0
        %v530 = vadd.f32 %v434, %v529
        %v531 = vpop.f32.mrb[0].mxu0
        %532 = vmatprep.mubr.bf16.mxu0 0
        %533 = vmatmul.mubr.bf16.gmra.mrb[0].mxu0 %v407
        %v534 = vpop.f32.mrb[0].mxu0
        %v535 = vadd.f32 %v434, %v534
        %v536 = vpop.f32.mrb[0].mxu0
        %v537 = vpop.f32.mrb[0].mxu0
        %v538 = vadd.f32 %v434, %v537
        %v539 = vpop.f32.mrb[0].mxu0
        %540 = vmatprep.mubr.bf16.mxu0 0
        %541 = vmatmul.mubr.bf16.gmra.mrb[0].mxu0 %v408
        %v542 = vpop.f32.mrb[0].mxu0
        %v543 = vadd.f32 %v434, %v542
        %v544 = vpop.f32.mrb[0].mxu0
        %v545 = vpop.f32.mrb[0].mxu0
        %v546 = vadd.f32 %v434, %v545
        %v547 = vpop.f32.mrb[0].mxu0
        %548 = vmatprep.mubr.bf16.mxu0 0
        %549 = vmatmul.mubr.bf16.gmra.mrb[0].mxu0 %v409
        %v550 = vpop.f32.mrb[0].mxu0
        %v551 = vadd.f32 %v434, %v550
        %v552 = vpop.f32.mrb[0].mxu0
        %v553 = vpop.f32.mrb[0].mxu0
        %v554 = vadd.f32 %v434, %v553
        %v555 = vpop.f32.mrb[0].mxu0
        %556 = vmatprep.mubr.bf16.mxu0 0
        %557 = vmatmul.mubr.bf16.gmra.mrb[0].mxu0 %v410
        %v558 = vpop.f32.mrb[0].mxu0
        %v559 = vadd.f32 %v434, %v558
        %v560 = vpop.f32.mrb[0].mxu0
        %v561 = vpop.f32.mrb[0].mxu0
        %v562 = vadd.f32 %v434, %v561
        %v563 = vpop.f32.mrb[0].mxu0
        %564 = vmatprep.mubr.bf16.mxu0 0
        %565 = vmatmul.mubr.bf16.gmra.mrb[0].mxu0 %v411
        %v566 = vpop.f32.mrb[0].mxu0
        %v567 = vadd.f32 %v434, %v566
        %v568 = vpop.f32.mrb[0].mxu0
        %v569 = vpop.f32.mrb[0].mxu0
        %v570 = vadd.f32 %v434, %v569
        %v571 = vpop.f32.mrb[0].mxu0
        %572 = vmatprep.mubr.bf16.mxu0 0
        %573 = vmatmul.mubr.bf16.gmra.mrb[0].mxu0 %v412
        %v574 = vpop.f32.mrb[0].mxu0
        %v575 = vadd.f32 %v434, %v574
        %v576 = vpop.f32.mrb[0].mxu0
        %v577 = vpop.f32.mrb[0].mxu0
        %v578 = vadd.f32 %v434, %v577
        %v579 = vpop.f32.mrb[0].mxu0
        %580 = vdwg.mxu0
        %v581 = vpack.c.bf16 %v522, %v519
        %v582 = vpack.c.bf16 %v530, %v527
        %v583 = vpack.c.bf16 %v538, %v535
        %v584 = vpack.c.bf16 %v546, %v543
        %v585 = vpack.c.bf16 %v554, %v551
        %v586 = vpack.c.bf16 %v562, %v559
        %v587 = vpack.c.bf16 %v570, %v567
        %v588 = vpack.c.bf16 %v578, %v575
        %v589 = vld [vmem:[#allocation2] sm:$0xf]
        %v590 = vld [vmem:[#allocation2 + $0x4] sm:$0xf]
        %v591 = vld [vmem:[#allocation2 + $0x8] sm:$0xf]
        %v592 = vld [vmem:[#allocation2 + $0xc] sm:$0xf]
        %v593 = vld [vmem:[#allocation2 + $0x10] sm:$0xf]
        %v594 = vld [vmem:[#allocation2 + $0x14] sm:$0xf]
        %v595 = vld [vmem:[#allocation2 + $0x18] sm:$0xf]
        %v596 = vld [vmem:[#allocation2 + $0x1c] sm:$0xf]
        %v597 = vld [vmem:[#allocation8] sm:$0xf]
        %v598 = vld [vmem:[#allocation8 + $0x4] sm:$0xf]
        %v599 = vld [vmem:[#allocation8 + $0x8] sm:$0xf]
        %v600 = vld [vmem:[#allocation8 + $0xc] sm:$0xf]
        %v601 = vld [vmem:[#allocation8 + $0x10] sm:$0xf]
        %v602 = vld [vmem:[#allocation8 + $0x14] sm:$0xf]
        %v603 = vld [vmem:[#allocation8 + $0x18] sm:$0xf]
        %v604 = vld [vmem:[#allocation8 + $0x1c] sm:$0xf]
        %v605 = vld [vmem:[#allocation8 + $0x20] sm:$0xf]
        %v606 = vld [vmem:[#allocation8 + $0x24] sm:$0xf]
        %v607 = vld [vmem:[#allocation8 + $0x28] sm:$0xf]
        %v608 = vld [vmem:[#allocation8 + $0x2c] sm:$0xf]
        %v609 = vld [vmem:[#allocation8 + $0x30] sm:$0xf]
        %v610 = vld [vmem:[#allocation8 + $0x34] sm:$0xf]
        %v611 = vld [vmem:[#allocation8 + $0x38] sm:$0xf]
        %v612 = vld [vmem:[#allocation8 + $0x3c] sm:$0xf]
        %v613 = vld [vmem:[%s7] sm:$0x1]
        %v615 = vlaneseq
        %v616 = vshrl.u32 %v615, 7
        %v617 = vsub.s32 0, %v616
        %v618 = vrot.slane %v613, %v617
        %v628 = vunpack.c.l.b16 %v589
        %v629 = vunpack.c.l.b16 %v590
        %v630 = vunpack.c.l.b16 %v591
        %v631 = vunpack.c.l.b16 %v592
        %v632 = vunpack.c.l.b16 %v593
        %v633 = vunpack.c.l.b16 %v594
        %v634 = vunpack.c.l.b16 %v595
        %v635 = vunpack.c.l.b16 %v596
        %v636 = vpack.c.b16 %v629, %v628
        %v637 = vpack.c.b16 %v631, %v630
        %v638 = vpack.c.b16 %v633, %v632
        %v639 = vpack.c.b16 %v635, %v634
        %v660 = vunpack.c.l.b16 %v597
        %v661 = vunpack.c.l.b16 %v598
        %v662 = vunpack.c.l.b16 %v599
        %v663 = vunpack.c.l.b16 %v600
        %v664 = vunpack.c.l.b16 %v601
        %v665 = vunpack.c.l.b16 %v602
        %v666 = vunpack.c.l.b16 %v603
        %v667 = vunpack.c.l.b16 %v604
        %v668 = vunpack.c.l.b16 %v605
        %v669 = vunpack.c.l.b16 %v606
        %v670 = vunpack.c.l.b16 %v607
        %v671 = vunpack.c.l.b16 %v608
        %v672 = vunpack.c.l.b16 %v609
        %v673 = vunpack.c.l.b16 %v610
        %v674 = vunpack.c.l.b16 %v611
        %v675 = vunpack.c.l.b16 %v612
        %v676 = vpack.c.b16 %v661, %v660
        %v677 = vpack.c.b16 %v663, %v662
        %v678 = vpack.c.b16 %v665, %v664
        %v679 = vpack.c.b16 %v667, %v666
        %v680 = vpack.c.b16 %v669, %v668
        %v681 = vpack.c.b16 %v671, %v670
        %v682 = vpack.c.b16 %v673, %v672
        %v683 = vpack.c.b16 %v675, %v674
        %692 = vmatprep.subr.bf16.mxu0 0
        %693 = vmatpush1.bf16.msra.mxu0 %v676
        %694 = vmatprep.subr.bf16.mxu0 0
        %695 = vmatpush1.bf16.msra.mxu0 %v677
        %696 = vmatprep.subr.bf16.mxu0 0
        %697 = vmatpush1.bf16.msra.mxu0 %v678
        %698 = vmatprep.subr.bf16.mxu0 0
        %699 = vmatpush1.bf16.msra.mxu0 %v679
        %700 = vmatprep.subr.bf16.mxu0 0
        %701 = vmatpush1.bf16.msra.mxu0 %v680
        %702 = vmatprep.subr.bf16.mxu0 0
        %703 = vmatpush1.bf16.msra.mxu0 %v681
        %704 = vmatprep.subr.bf16.mxu0 0
        %705 = vmatpush1.bf16.msra.mxu0 %v682
        %706 = vmatprep.subr.bf16.mxu0 0
        %707 = vmatpush1.bf16.msra.mxu0 %v683
        %708 = vmatprep.subr.bf16.mxu0 0
        %709 = vmatpush1.bf16.msra.mxu0 0
        %710 = vmatprep.subr.bf16.mxu0 0
        %711 = vmatpush1.bf16.msra.mxu0 0
        %712 = vmatprep.subr.bf16.mxu0 0
        %713 = vmatpush1.bf16.msra.mxu0 0
        %714 = vmatprep.subr.bf16.mxu0 0
        %715 = vmatpush1.bf16.msra.mxu0 0
        %716 = vmatprep.subr.bf16.mxu0 0
        %717 = vmatpush1.bf16.msra.mxu0 0
        %718 = vmatprep.subr.bf16.mxu0 0
        %719 = vmatpush1.bf16.msra.mxu0 0
        %720 = vmatprep.subr.bf16.mxu0 0
        %721 = vmatpush1.bf16.msra.mxu0 0
        %722 = vmatprep.subr.bf16.mxu0 0
        %723 = vmatpush1.bf16.msra.mxu0 0
        %724 = vmatprep.mubr.bf16.mxu0 0
        %725 = vmatmul.mubr.bf16.gmra.mrb[0].mxu0 %v636
        %v726 = vpop.f32.mrb[0].mxu0
        %v727 = vadd.f32 %v618, %v726
        %v728 = vpop.f32.mrb[0].mxu0
        %v729 = vpop.f32.mrb[0].mxu0
        %v730 = vadd.f32 %v618, %v729
        %v731 = vpop.f32.mrb[0].mxu0
        %732 = vmatprep.mubr.bf16.mxu0 0
        %733 = vmatmul.mubr.bf16.gmra.mrb[0].mxu0 %v637
        %v734 = vpop.f32.mrb[0].mxu0
        %v735 = vadd.f32 %v618, %v734
        %v736 = vpop.f32.mrb[0].mxu0
        %v737 = vpop.f32.mrb[0].mxu0
        %v738 = vadd.f32 %v618, %v737
        %v739 = vpop.f32.mrb[0].mxu0
        %740 = vmatprep.mubr.bf16.mxu0 0
        %741 = vmatmul.mubr.bf16.gmra.mrb[0].mxu0 %v638
        %v742 = vpop.f32.mrb[0].mxu0
        %v743 = vadd.f32 %v618, %v742
        %v744 = vpop.f32.mrb[0].mxu0
        %v745 = vpop.f32.mrb[0].mxu0
        %v746 = vadd.f32 %v618, %v745
        %v747 = vpop.f32.mrb[0].mxu0
        %748 = vmatprep.mubr.bf16.mxu0 0
        %749 = vmatmul.mubr.bf16.gmra.mrb[0].mxu0 %v639
        %v750 = vpop.f32.mrb[0].mxu0
        %v751 = vadd.f32 %v618, %v750
        %v752 = vpop.f32.mrb[0].mxu0
        %v753 = vpop.f32.mrb[0].mxu0
        %v754 = vadd.f32 %v618, %v753
        %v755 = vpop.f32.mrb[0].mxu0
        %756 = vdwg.mxu0
        %v757 = vpack.c.bf16 %v730, %v727
        %v758 = vpack.c.bf16 %v738, %v735
        %v759 = vpack.c.bf16 %v746, %v743
        %v760 = vpack.c.bf16 %v754, %v751
        %761 = vmatprep.subr.bf16.mxu0 0
        %762 = vmatpush1.bf16.xpose.msra.mxu0 %v757
        %763 = vmatprep.subr.bf16.mxu0 0
        %764 = vmatpush1.bf16.xpose.msra.mxu0 %v758
        %765 = vmatprep.subr.bf16.mxu0 0
        %766 = vmatpush1.bf16.xpose.msra.mxu0 %v759
        %767 = vmatprep.subr.bf16.mxu0 0
        %768 = vmatpush1.bf16.xpose.msra.mxu0 %v760
        %769 = vmatprep.subr.bf16.mxu0 0
        %770 = vmatpush1.bf16.xpose.msra.mxu0 0
        %771 = vmatprep.subr.bf16.mxu0 0
        %772 = vmatpush1.bf16.xpose.msra.mxu0 0
        %773 = vmatprep.subr.bf16.mxu0 0
        %774 = vmatpush1.bf16.xpose.msra.mxu0 0
        %775 = vmatprep.subr.bf16.mxu0 0
        %776 = vmatpush1.bf16.xpose.msra.mxu0 0
        %777 = vmatprep.subr.bf16.mxu0 0
        %778 = vmatpush1.bf16.xpose.msra.mxu0 0
        %779 = vmatprep.subr.bf16.mxu0 0
        %780 = vmatpush1.bf16.xpose.msra.mxu0 0
        %781 = vmatprep.subr.bf16.mxu0 0
        %782 = vmatpush1.bf16.xpose.msra.mxu0 0
        %783 = vmatprep.subr.bf16.mxu0 0
        %784 = vmatpush1.bf16.xpose.msra.mxu0 0
        %785 = vmatprep.subr.bf16.mxu0 0
        %786 = vmatpush1.bf16.xpose.msra.mxu0 0
        %787 = vmatprep.subr.bf16.mxu0 0
        %788 = vmatpush1.bf16.xpose.msra.mxu0 0
        %789 = vmatprep.subr.bf16.mxu0 0
        %790 = vmatpush1.bf16.xpose.msra.mxu0 0
        %791 = vmatprep.subr.bf16.mxu0 0
        %792 = vmatpush1.bf16.xpose.msra.mxu0 0
        %793 = vmatprep.mubr.bf16.mxu0 0
        %794 = vmatmul.mubr.bf16.gmra.mrb[0].mxu0 %v581
        %v795 = vpop.f32.mrb[0].mxu0
        %v796 = vadd.f32 0.0, %v795
        %v797 = vpop.f32.mrb[0].mxu0
        %v798 = vpop.f32.mrb[0].mxu0
        %v799 = vadd.f32 0.0, %v798
        %v800 = vpop.f32.mrb[0].mxu0
        %801 = vmatprep.mubr.bf16.mxu0 0
        %802 = vmatmul.mubr.bf16.gmra.mrb[0].mxu0 %v582
        %v803 = vpop.f32.mrb[0].mxu0
        %v804 = vadd.f32 0.0, %v803
        %v805 = vpop.f32.mrb[0].mxu0
        %v806 = vpop.f32.mrb[0].mxu0
        %v807 = vadd.f32 0.0, %v806
        %v808 = vpop.f32.mrb[0].mxu0
        %809 = vmatprep.mubr.bf16.mxu0 0
        %810 = vmatmul.mubr.bf16.gmra.mrb[0].mxu0 %v583
        %v811 = vpop.f32.mrb[0].mxu0
        %v812 = vadd.f32 0.0, %v811
        %v813 = vpop.f32.mrb[0].mxu0
        %v814 = vpop.f32.mrb[0].mxu0
        %v815 = vadd.f32 0.0, %v814
        %v816 = vpop.f32.mrb[0].mxu0
        %817 = vmatprep.mubr.bf16.mxu0 0
        %818 = vmatmul.mubr.bf16.gmra.mrb[0].mxu0 %v584
        %v819 = vpop.f32.mrb[0].mxu0
        %v820 = vadd.f32 0.0, %v819
        %v821 = vpop.f32.mrb[0].mxu0
        %v822 = vpop.f32.mrb[0].mxu0
        %v823 = vadd.f32 0.0, %v822
        %v824 = vpop.f32.mrb[0].mxu0
        %825 = vmatprep.mubr.bf16.mxu0 0
        %826 = vmatmul.mubr.bf16.gmra.mrb[0].mxu0 %v585
        %v827 = vpop.f32.mrb[0].mxu0
        %v828 = vadd.f32 0.0, %v827
        %v829 = vpop.f32.mrb[0].mxu0
        %v830 = vpop.f32.mrb[0].mxu0
        %v831 = vadd.f32 0.0, %v830
        %v832 = vpop.f32.mrb[0].mxu0
        %833 = vmatprep.mubr.bf16.mxu0 0
        %834 = vmatmul.mubr.bf16.gmra.mrb[0].mxu0 %v586
        %v835 = vpop.f32.mrb[0].mxu0
        %v836 = vadd.f32 0.0, %v835
        %v837 = vpop.f32.mrb[0].mxu0
        %v838 = vpop.f32.mrb[0].mxu0
        %v839 = vadd.f32 0.0, %v838
        %v840 = vpop.f32.mrb[0].mxu0
        %841 = vmatprep.mubr.bf16.mxu0 0
        %842 = vmatmul.mubr.bf16.gmra.mrb[0].mxu0 %v587
        %v843 = vpop.f32.mrb[0].mxu0
        %v844 = vadd.f32 0.0, %v843
        %v845 = vpop.f32.mrb[0].mxu0
        %v846 = vpop.f32.mrb[0].mxu0
        %v847 = vadd.f32 0.0, %v846
        %v848 = vpop.f32.mrb[0].mxu0
        %849 = vmatprep.mubr.bf16.mxu0 0
        %850 = vmatmul.mubr.bf16.gmra.mrb[0].mxu0 %v588
        %v851 = vpop.f32.mrb[0].mxu0
        %v852 = vadd.f32 0.0, %v851
        %v853 = vpop.f32.mrb[0].mxu0
        %v854 = vpop.f32.mrb[0].mxu0
        %v855 = vadd.f32 0.0, %v854
        %v856 = vpop.f32.mrb[0].mxu0
        %857 = vdwg.mxu0
        %v858 = vlaneseq
        %v859 = vand.u32 %v858, 127
        %v860 = vld [vmem:[%s385] sm:$0xff]
        %v861 = vld [vmem:[%s385 + $0x8] sm:$0xff]
        %v862 = vld [vmem:[%s385 + $0x10] sm:$0xff]
        %v863 = vld [vmem:[%s385 + $0x18] sm:$0xff]
        %v864 = vld [vmem:[%s385 + $0x20] sm:$0xff]
        %v865 = vld [vmem:[%s385 + $0x28] sm:$0xff]
        %v866 = vld [vmem:[%s385 + $0x30] sm:$0xff]
        %v867 = vld [vmem:[%s385 + $0x38] sm:$0xff]
        %v868 = vld [vmem:[%s385 + $0x40] sm:$0xff]
        %v869 = vld [vmem:[%s385 + $0x48] sm:$0xff]
        %v870 = vld [vmem:[%s385 + $0x50] sm:$0xff]
        %v871 = vld [vmem:[%s385 + $0x58] sm:$0xff]
        %v872 = vld [vmem:[%s385 + $0x60] sm:$0xff]
        %v873 = vld [vmem:[%s385 + $0x68] sm:$0xff]
        %v874 = vld [vmem:[%s385 + $0x70] sm:$0xff]
        %v875 = vld [vmem:[%s385 + $0x78] sm:$0xff]
        %876 = vset.pattern.permute.xlu0 0
        %877 = vperm.xlu0 %876, %v860
        %v878 = vpop.permute.xlu0 %877
        %879 = vset.pattern.permute.xlu0 0
        %880 = vperm.xlu0 %879, %v861
        %v881 = vpop.permute.xlu0 %880
        %882 = vset.pattern.permute.xlu0 0
        %883 = vperm.xlu0 %882, %v862
        %v884 = vpop.permute.xlu0 %883
        %885 = vset.pattern.permute.xlu0 0
        %886 = vperm.xlu0 %885, %v863
        %v887 = vpop.permute.xlu0 %886
        %888 = vset.pattern.permute.xlu0 0
        %889 = vperm.xlu0 %888, %v864
        %v890 = vpop.permute.xlu0 %889
        %891 = vset.pattern.permute.xlu0 0
        %892 = vperm.xlu0 %891, %v865
        %v893 = vpop.permute.xlu0 %892
        %894 = vset.pattern.permute.xlu0 0
        %895 = vperm.xlu0 %894, %v866
        %v896 = vpop.permute.xlu0 %895
        %897 = vset.pattern.permute.xlu0 0
        %898 = vperm.xlu0 %897, %v867
        %v899 = vpop.permute.xlu0 %898
        %900 = vset.pattern.permute.xlu0 0
        %901 = vperm.xlu0 %900, %v868
        %v902 = vpop.permute.xlu0 %901
        %903 = vset.pattern.permute.xlu0 0
        %904 = vperm.xlu0 %903, %v869
        %v905 = vpop.permute.xlu0 %904
        %906 = vset.pattern.permute.xlu0 0
        %907 = vperm.xlu0 %906, %v870
        %v908 = vpop.permute.xlu0 %907
        %909 = vset.pattern.permute.xlu0 0
        %910 = vperm.xlu0 %909, %v871
        %v911 = vpop.permute.xlu0 %910
        %912 = vset.pattern.permute.xlu0 0
        %913 = vperm.xlu0 %912, %v872
        %v914 = vpop.permute.xlu0 %913
        %915 = vset.pattern.permute.xlu0 0
        %916 = vperm.xlu0 %915, %v873
        %v917 = vpop.permute.xlu0 %916
        %918 = vset.pattern.permute.xlu0 0
        %919 = vperm.xlu0 %918, %v874
        %v920 = vpop.permute.xlu0 %919
        %921 = vset.pattern.permute.xlu0 0
        %922 = vperm.xlu0 %921, %v875
        %v923 = vpop.permute.xlu0 %922
        %vm924 = vcmp.eq.s32.totalorder %v878, %v859
        %vm925 = vcmp.eq.s32.totalorder %v881, %v859
        %vm926 = vcmp.eq.s32.totalorder %v884, %v859
        %vm927 = vcmp.eq.s32.totalorder %v887, %v859
        %vm928 = vcmp.eq.s32.totalorder %v890, %v859
        %vm929 = vcmp.eq.s32.totalorder %v893, %v859
        %vm930 = vcmp.eq.s32.totalorder %v896, %v859
        %vm931 = vcmp.eq.s32.totalorder %v899, %v859
        %vm932 = vcmp.eq.s32.totalorder %v902, %v859
        %vm933 = vcmp.eq.s32.totalorder %v905, %v859
        %vm934 = vcmp.eq.s32.totalorder %v908, %v859
        %vm935 = vcmp.eq.s32.totalorder %v911, %v859
        %vm936 = vcmp.eq.s32.totalorder %v914, %v859
        %vm937 = vcmp.eq.s32.totalorder %v917, %v859
        %vm938 = vcmp.eq.s32.totalorder %v920, %v859
        %vm939 = vcmp.eq.s32.totalorder %v923, %v859
        %940 = vset.pattern.permute.xlu0 1
        %941 = vperm.xlu0 %940, %v860
        %v942 = vpop.permute.xlu0 %941
        %943 = vset.pattern.permute.xlu0 1
        %944 = vperm.xlu0 %943, %v861
        %v945 = vpop.permute.xlu0 %944
        %946 = vset.pattern.permute.xlu0 1
        %947 = vperm.xlu0 %946, %v862
        %v948 = vpop.permute.xlu0 %947
        %949 = vset.pattern.permute.xlu0 1
        %950 = vperm.xlu0 %949, %v863
        %v951 = vpop.permute.xlu0 %950
        %952 = vset.pattern.permute.xlu0 1
        %953 = vperm.xlu0 %952, %v864
        %v954 = vpop.permute.xlu0 %953
        %955 = vset.pattern.permute.xlu0 1
        %956 = vperm.xlu0 %955, %v865
        %v957 = vpop.permute.xlu0 %956
        %958 = vset.pattern.permute.xlu0 1
        %959 = vperm.xlu0 %958, %v866
        %v960 = vpop.permute.xlu0 %959
        %961 = vset.pattern.permute.xlu0 1
        %962 = vperm.xlu0 %961, %v867
        %v963 = vpop.permute.xlu0 %962
        %964 = vset.pattern.permute.xlu0 1
        %965 = vperm.xlu0 %964, %v868
        %v966 = vpop.permute.xlu0 %965
        %967 = vset.pattern.permute.xlu0 1
        %968 = vperm.xlu0 %967, %v869
        %v969 = vpop.permute.xlu0 %968
        %970 = vset.pattern.permute.xlu0 1
        %971 = vperm.xlu0 %970, %v870
        %v972 = vpop.permute.xlu0 %971
        %973 = vset.pattern.permute.xlu0 1
        %974 = vperm.xlu0 %973, %v871
        %v975 = vpop.permute.xlu0 %974
        %976 = vset.pattern.permute.xlu0 1
        %977 = vperm.xlu0 %976, %v872
        %v978 = vpop.permute.xlu0 %977
        %979 = vset.pattern.permute.xlu0 1
        %980 = vperm.xlu0 %979, %v873
        %v981 = vpop.permute.xlu0 %980
        %982 = vset.pattern.permute.xlu0 1
        %983 = vperm.xlu0 %982, %v874
        %v984 = vpop.permute.xlu0 %983
        %985 = vset.pattern.permute.xlu0 1
        %986 = vperm.xlu0 %985, %v875
        %v987 = vpop.permute.xlu0 %986
        %vm988 = vcmp.eq.s32.totalorder %v942, %v859
        %vm989 = vcmp.eq.s32.totalorder %v945, %v859
        %vm990 = vcmp.eq.s32.totalorder %v948, %v859
        %vm991 = vcmp.eq.s32.totalorder %v951, %v859
        %vm992 = vcmp.eq.s32.totalorder %v954, %v859
        %vm993 = vcmp.eq.s32.totalorder %v957, %v859
        %vm994 = vcmp.eq.s32.totalorder %v960, %v859
        %vm995 = vcmp.eq.s32.totalorder %v963, %v859
        %vm996 = vcmp.eq.s32.totalorder %v966, %v859
        %vm997 = vcmp.eq.s32.totalorder %v969, %v859
        %vm998 = vcmp.eq.s32.totalorder %v972, %v859
        %vm999 = vcmp.eq.s32.totalorder %v975, %v859
        %vm1000 = vcmp.eq.s32.totalorder %v978, %v859
        %vm1001 = vcmp.eq.s32.totalorder %v981, %v859
        %vm1002 = vcmp.eq.s32.totalorder %v984, %v859
        %vm1003 = vcmp.eq.s32.totalorder %v987, %v859
        %vm1004 = vmor %vm924, %vm988
        %vm1005 = vmor %vm925, %vm989
        %vm1006 = vmor %vm926, %vm990
        %vm1007 = vmor %vm927, %vm991
        %vm1008 = vmor %vm928, %vm992
        %vm1009 = vmor %vm929, %vm993
        %vm1010 = vmor %vm930, %vm994
        %vm1011 = vmor %vm931, %vm995
        %vm1012 = vmor %vm932, %vm996
        %vm1013 = vmor %vm933, %vm997
        %vm1014 = vmor %vm934, %vm998
        %vm1015 = vmor %vm935, %vm999
        %vm1016 = vmor %vm936, %vm1000
        %vm1017 = vmor %vm937, %vm1001
        %vm1018 = vmor %vm938, %vm1002
        %vm1019 = vmor %vm939, %vm1003
        %1020 = vset.pattern.permute.xlu0 2
        %1021 = vperm.xlu0 %1020, %v860
        %v1022 = vpop.permute.xlu0 %1021
        %1023 = vset.pattern.permute.xlu0 2
        %1024 = vperm.xlu0 %1023, %v861
        %v1025 = vpop.permute.xlu0 %1024
        %1026 = vset.pattern.permute.xlu0 2
        %1027 = vperm.xlu0 %1026, %v862
        %v1028 = vpop.permute.xlu0 %1027
        %1029 = vset.pattern.permute.xlu0 2
        %1030 = vperm.xlu0 %1029, %v863
        %v1031 = vpop.permute.xlu0 %1030
        %1032 = vset.pattern.permute.xlu0 2
        %1033 = vperm.xlu0 %1032, %v864
        %v1034 = vpop.permute.xlu0 %1033
        %1035 = vset.pattern.permute.xlu0 2
        %1036 = vperm.xlu0 %1035, %v865
        %v1037 = vpop.permute.xlu0 %1036
        %1038 = vset.pattern.permute.xlu0 2
        %1039 = vperm.xlu0 %1038, %v866
        %v1040 = vpop.permute.xlu0 %1039
        %1041 = vset.pattern.permute.xlu0 2
        %1042 = vperm.xlu0 %1041, %v867
        %v1043 = vpop.permute.xlu0 %1042
        %1044 = vset.pattern.permute.xlu0 2
        %1045 = vperm.xlu0 %1044, %v868
        %v1046 = vpop.permute.xlu0 %1045
        %1047 = vset.pattern.permute.xlu0 2
        %1048 = vperm.xlu0 %1047, %v869
        %v1049 = vpop.permute.xlu0 %1048
        %1050 = vset.pattern.permute.xlu0 2
        %1051 = vperm.xlu0 %1050, %v870
        %v1052 = vpop.permute.xlu0 %1051
        %1053 = vset.pattern.permute.xlu0 2
        %1054 = vperm.xlu0 %1053, %v871
        %v1055 = vpop.permute.xlu0 %1054
        %1056 = vset.pattern.permute.xlu0 2
        %1057 = vperm.xlu0 %1056, %v872
        %v1058 = vpop.permute.xlu0 %1057
        %1059 = vset.pattern.permute.xlu0 2
        %1060 = vperm.xlu0 %1059, %v873
        %v1061 = vpop.permute.xlu0 %1060
        %1062 = vset.pattern.permute.xlu0 2
        %1063 = vperm.xlu0 %1062, %v874
        %v1064 = vpop.permute.xlu0 %1063
        %1065 = vset.pattern.permute.xlu0 2
        %1066 = vperm.xlu0 %1065, %v875
        %v1067 = vpop.permute.xlu0 %1066
        %vm1068 = vcmp.eq.s32.totalorder %v1022, %v859
        %vm1069 = vcmp.eq.s32.totalorder %v1025, %v859
        %vm1070 = vcmp.eq.s32.totalorder %v1028, %v859
        %vm1071 = vcmp.eq.s32.totalorder %v1031, %v859
        %vm1072 = vcmp.eq.s32.totalorder %v1034, %v859
        %vm1073 = vcmp.eq.s32.totalorder %v1037, %v859
        %vm1074 = vcmp.eq.s32.totalorder %v1040, %v859
        %vm1075 = vcmp.eq.s32.totalorder %v1043, %v859
        %vm1076 = vcmp.eq.s32.totalorder %v1046, %v859
        %vm1077 = vcmp.eq.s32.totalorder %v1049, %v859
        %vm1078 = vcmp.eq.s32.totalorder %v1052, %v859
        %vm1079 = vcmp.eq.s32.totalorder %v1055, %v859
        %vm1080 = vcmp.eq.s32.totalorder %v1058, %v859
        %vm1081 = vcmp.eq.s32.totalorder %v1061, %v859
        %vm1082 = vcmp.eq.s32.totalorder %v1064, %v859
        %vm1083 = vcmp.eq.s32.totalorder %v1067, %v859
        %vm1084 = vmor %vm1004, %vm1068
        %vm1085 = vmor %vm1005, %vm1069
        %vm1086 = vmor %vm1006, %vm1070
        %vm1087 = vmor %vm1007, %vm1071
        %vm1088 = vmor %vm1008, %vm1072
        %vm1089 = vmor %vm1009, %vm1073
        %vm1090 = vmor %vm1010, %vm1074
        %vm1091 = vmor %vm1011, %vm1075
        %vm1092 = vmor %vm1012, %vm1076
        %vm1093 = vmor %vm1013, %vm1077
        %vm1094 = vmor %vm1014, %vm1078
        %vm1095 = vmor %vm1015, %vm1079
        %vm1096 = vmor %vm1016, %vm1080
        %vm1097 = vmor %vm1017, %vm1081
        %vm1098 = vmor %vm1018, %vm1082
        %vm1099 = vmor %vm1019, %vm1083
        %1100 = vset.pattern.permute.xlu0 3
        %1101 = vperm.xlu0 %1100, %v860
        %v1102 = vpop.permute.xlu0 %1101
        %1103 = vset.pattern.permute.xlu0 3
        %1104 = vperm.xlu0 %1103, %v861
        %v1105 = vpop.permute.xlu0 %1104
        %1106 = vset.pattern.permute.xlu0 3
        %1107 = vperm.xlu0 %1106, %v862
        %v1108 = vpop.permute.xlu0 %1107
        %1109 = vset.pattern.permute.xlu0 3
        %1110 = vperm.xlu0 %1109, %v863
        %v1111 = vpop.permute.xlu0 %1110
        %1112 = vset.pattern.permute.xlu0 3
        %1113 = vperm.xlu0 %1112, %v864
        %v1114 = vpop.permute.xlu0 %1113
        %1115 = vset.pattern.permute.xlu0 3
        %1116 = vperm.xlu0 %1115, %v865
        %v1117 = vpop.permute.xlu0 %1116
        %1118 = vset.pattern.permute.xlu0 3
        %1119 = vperm.xlu0 %1118, %v866
        %v1120 = vpop.permute.xlu0 %1119
        %1121 = vset.pattern.permute.xlu0 3
        %1122 = vperm.xlu0 %1121, %v867
        %v1123 = vpop.permute.xlu0 %1122
        %1124 = vset.pattern.permute.xlu0 3
        %1125 = vperm.xlu0 %1124, %v868
        %v1126 = vpop.permute.xlu0 %1125
        %1127 = vset.pattern.permute.xlu0 3
        %1128 = vperm.xlu0 %1127, %v869
        %v1129 = vpop.permute.xlu0 %1128
        %1130 = vset.pattern.permute.xlu0 3
        %1131 = vperm.xlu0 %1130, %v870
        %v1132 = vpop.permute.xlu0 %1131
        %1133 = vset.pattern.permute.xlu0 3
        %1134 = vperm.xlu0 %1133, %v871
        %v1135 = vpop.permute.xlu0 %1134
        %1136 = vset.pattern.permute.xlu0 3
        %1137 = vperm.xlu0 %1136, %v872
        %v1138 = vpop.permute.xlu0 %1137
        %1139 = vset.pattern.permute.xlu0 3
        %1140 = vperm.xlu0 %1139, %v873
        %v1141 = vpop.permute.xlu0 %1140
        %1142 = vset.pattern.permute.xlu0 3
        %1143 = vperm.xlu0 %1142, %v874
        %v1144 = vpop.permute.xlu0 %1143
        %1145 = vset.pattern.permute.xlu0 3
        %1146 = vperm.xlu0 %1145, %v875
        %v1147 = vpop.permute.xlu0 %1146
        %vm1148 = vcmp.eq.s32.totalorder %v1102, %v859
        %vm1149 = vcmp.eq.s32.totalorder %v1105, %v859
        %vm1150 = vcmp.eq.s32.totalorder %v1108, %v859
        %vm1151 = vcmp.eq.s32.totalorder %v1111, %v859
        %vm1152 = vcmp.eq.s32.totalorder %v1114, %v859
        %vm1153 = vcmp.eq.s32.totalorder %v1117, %v859
        %vm1154 = vcmp.eq.s32.totalorder %v1120, %v859
        %vm1155 = vcmp.eq.s32.totalorder %v1123, %v859
        %vm1156 = vcmp.eq.s32.totalorder %v1126, %v859
        %vm1157 = vcmp.eq.s32.totalorder %v1129, %v859
        %vm1158 = vcmp.eq.s32.totalorder %v1132, %v859
        %vm1159 = vcmp.eq.s32.totalorder %v1135, %v859
        %vm1160 = vcmp.eq.s32.totalorder %v1138, %v859
        %vm1161 = vcmp.eq.s32.totalorder %v1141, %v859
        %vm1162 = vcmp.eq.s32.totalorder %v1144, %v859
        %vm1163 = vcmp.eq.s32.totalorder %v1147, %v859
        %vm1164 = vmor %vm1084, %vm1148
        %vm1165 = vmor %vm1085, %vm1149
        %vm1166 = vmor %vm1086, %vm1150
        %vm1167 = vmor %vm1087, %vm1151
        %vm1168 = vmor %vm1088, %vm1152
        %vm1169 = vmor %vm1089, %vm1153
        %vm1170 = vmor %vm1090, %vm1154
        %vm1171 = vmor %vm1091, %vm1155
        %vm1172 = vmor %vm1092, %vm1156
        %vm1173 = vmor %vm1093, %vm1157
        %vm1174 = vmor %vm1094, %vm1158
        %vm1175 = vmor %vm1095, %vm1159
        %vm1176 = vmor %vm1096, %vm1160
        %vm1177 = vmor %vm1097, %vm1161
        %vm1178 = vmor %vm1098, %vm1162
        %vm1179 = vmor %vm1099, %vm1163
        %1180 = vset.pattern.permute.xlu0 4
        %1181 = vperm.xlu0 %1180, %v860
        %v1182 = vpop.permute.xlu0 %1181
        %1183 = vset.pattern.permute.xlu0 4
        %1184 = vperm.xlu0 %1183, %v861
        %v1185 = vpop.permute.xlu0 %1184
        %1186 = vset.pattern.permute.xlu0 4
        %1187 = vperm.xlu0 %1186, %v862
        %v1188 = vpop.permute.xlu0 %1187
        %1189 = vset.pattern.permute.xlu0 4
        %1190 = vperm.xlu0 %1189, %v863
        %v1191 = vpop.permute.xlu0 %1190
        %1192 = vset.pattern.permute.xlu0 4
        %1193 = vperm.xlu0 %1192, %v864
        %v1194 = vpop.permute.xlu0 %1193
        %1195 = vset.pattern.permute.xlu0 4
        %1196 = vperm.xlu0 %1195, %v865
        %v1197 = vpop.permute.xlu0 %1196
        %1198 = vset.pattern.permute.xlu0 4
        %1199 = vperm.xlu0 %1198, %v866
        %v1200 = vpop.permute.xlu0 %1199
        %1201 = vset.pattern.permute.xlu0 4
        %1202 = vperm.xlu0 %1201, %v867
        %v1203 = vpop.permute.xlu0 %1202
        %1204 = vset.pattern.permute.xlu0 4
        %1205 = vperm.xlu0 %1204, %v868
        %v1206 = vpop.permute.xlu0 %1205
        %1207 = vset.pattern.permute.xlu0 4
        %1208 = vperm.xlu0 %1207, %v869
        %v1209 = vpop.permute.xlu0 %1208
        %1210 = vset.pattern.permute.xlu0 4
        %1211 = vperm.xlu0 %1210, %v870
        %v1212 = vpop.permute.xlu0 %1211
        %1213 = vset.pattern.permute.xlu0 4
        %1214 = vperm.xlu0 %1213, %v871
        %v1215 = vpop.permute.xlu0 %1214
        %1216 = vset.pattern.permute.xlu0 4
        %1217 = vperm.xlu0 %1216, %v872
        %v1218 = vpop.permute.xlu0 %1217
        %1219 = vset.pattern.permute.xlu0 4
        %1220 = vperm.xlu0 %1219, %v873
        %v1221 = vpop.permute.xlu0 %1220
        %1222 = vset.pattern.permute.xlu0 4
        %1223 = vperm.xlu0 %1222, %v874
        %v1224 = vpop.permute.xlu0 %1223
        %1225 = vset.pattern.permute.xlu0 4
        %1226 = vperm.xlu0 %1225, %v875
        %v1227 = vpop.permute.xlu0 %1226
        %vm1228 = vcmp.eq.s32.totalorder %v1182, %v859
        %vm1229 = vcmp.eq.s32.totalorder %v1185, %v859
        %vm1230 = vcmp.eq.s32.totalorder %v1188, %v859
        %vm1231 = vcmp.eq.s32.totalorder %v1191, %v859
        %vm1232 = vcmp.eq.s32.totalorder %v1194, %v859
        %vm1233 = vcmp.eq.s32.totalorder %v1197, %v859
        %vm1234 = vcmp.eq.s32.totalorder %v1200, %v859
        %vm1235 = vcmp.eq.s32.totalorder %v1203, %v859
        %vm1236 = vcmp.eq.s32.totalorder %v1206, %v859
        %vm1237 = vcmp.eq.s32.totalorder %v1209, %v859
        %vm1238 = vcmp.eq.s32.totalorder %v1212, %v859
        %vm1239 = vcmp.eq.s32.totalorder %v1215, %v859
        %vm1240 = vcmp.eq.s32.totalorder %v1218, %v859
        %vm1241 = vcmp.eq.s32.totalorder %v1221, %v859
        %vm1242 = vcmp.eq.s32.totalorder %v1224, %v859
        %vm1243 = vcmp.eq.s32.totalorder %v1227, %v859
        %vm1244 = vmor %vm1164, %vm1228
        %vm1245 = vmor %vm1165, %vm1229
        %vm1246 = vmor %vm1166, %vm1230
        %vm1247 = vmor %vm1167, %vm1231
        %vm1248 = vmor %vm1168, %vm1232
        %vm1249 = vmor %vm1169, %vm1233
        %vm1250 = vmor %vm1170, %vm1234
        %vm1251 = vmor %vm1171, %vm1235
        %vm1252 = vmor %vm1172, %vm1236
        %vm1253 = vmor %vm1173, %vm1237
        %vm1254 = vmor %vm1174, %vm1238
        %vm1255 = vmor %vm1175, %vm1239
        %vm1256 = vmor %vm1176, %vm1240
        %vm1257 = vmor %vm1177, %vm1241
        %vm1258 = vmor %vm1178, %vm1242
        %vm1259 = vmor %vm1179, %vm1243
        %1260 = vset.pattern.permute.xlu0 5
        %1261 = vperm.xlu0 %1260, %v860
        %v1262 = vpop.permute.xlu0 %1261
        %1263 = vset.pattern.permute.xlu0 5
        %1264 = vperm.xlu0 %1263, %v861
        %v1265 = vpop.permute.xlu0 %1264
        %1266 = vset.pattern.permute.xlu0 5
        %1267 = vperm.xlu0 %1266, %v862
        %v1268 = vpop.permute.xlu0 %1267
        %1269 = vset.pattern.permute.xlu0 5
        %1270 = vperm.xlu0 %1269, %v863
        %v1271 = vpop.permute.xlu0 %1270
        %1272 = vset.pattern.permute.xlu0 5
        %1273 = vperm.xlu0 %1272, %v864
        %v1274 = vpop.permute.xlu0 %1273
        %1275 = vset.pattern.permute.xlu0 5
        %1276 = vperm.xlu0 %1275, %v865
        %v1277 = vpop.permute.xlu0 %1276
        %1278 = vset.pattern.permute.xlu0 5
        %1279 = vperm.xlu0 %1278, %v866
        %v1280 = vpop.permute.xlu0 %1279
        %1281 = vset.pattern.permute.xlu0 5
        %1282 = vperm.xlu0 %1281, %v867
        %v1283 = vpop.permute.xlu0 %1282
        %1284 = vset.pattern.permute.xlu0 5
        %1285 = vperm.xlu0 %1284, %v868
        %v1286 = vpop.permute.xlu0 %1285
        %1287 = vset.pattern.permute.xlu0 5
        %1288 = vperm.xlu0 %1287, %v869
        %v1289 = vpop.permute.xlu0 %1288
        %1290 = vset.pattern.permute.xlu0 5
        %1291 = vperm.xlu0 %1290, %v870
        %v1292 = vpop.permute.xlu0 %1291
        %1293 = vset.pattern.permute.xlu0 5
        %1294 = vperm.xlu0 %1293, %v871
        %v1295 = vpop.permute.xlu0 %1294
        %1296 = vset.pattern.permute.xlu0 5
        %1297 = vperm.xlu0 %1296, %v872
        %v1298 = vpop.permute.xlu0 %1297
        %1299 = vset.pattern.permute.xlu0 5
        %1300 = vperm.xlu0 %1299, %v873
        %v1301 = vpop.permute.xlu0 %1300
        %1302 = vset.pattern.permute.xlu0 5
        %1303 = vperm.xlu0 %1302, %v874
        %v1304 = vpop.permute.xlu0 %1303
        %1305 = vset.pattern.permute.xlu0 5
        %1306 = vperm.xlu0 %1305, %v875
        %v1307 = vpop.permute.xlu0 %1306
        %vm1308 = vcmp.eq.s32.totalorder %v1262, %v859
        %vm1309 = vcmp.eq.s32.totalorder %v1265, %v859
        %vm1310 = vcmp.eq.s32.totalorder %v1268, %v859
        %vm1311 = vcmp.eq.s32.totalorder %v1271, %v859
        %vm1312 = vcmp.eq.s32.totalorder %v1274, %v859
        %vm1313 = vcmp.eq.s32.totalorder %v1277, %v859
        %vm1314 = vcmp.eq.s32.totalorder %v1280, %v859
        %vm1315 = vcmp.eq.s32.totalorder %v1283, %v859
        %vm1316 = vcmp.eq.s32.totalorder %v1286, %v859
        %vm1317 = vcmp.eq.s32.totalorder %v1289, %v859
        %vm1318 = vcmp.eq.s32.totalorder %v1292, %v859
        %vm1319 = vcmp.eq.s32.totalorder %v1295, %v859
        %vm1320 = vcmp.eq.s32.totalorder %v1298, %v859
        %vm1321 = vcmp.eq.s32.totalorder %v1301, %v859
        %vm1322 = vcmp.eq.s32.totalorder %v1304, %v859
        %vm1323 = vcmp.eq.s32.totalorder %v1307, %v859
        %vm1324 = vmor %vm1244, %vm1308
        %vm1325 = vmor %vm1245, %vm1309
        %vm1326 = vmor %vm1246, %vm1310
        %vm1327 = vmor %vm1247, %vm1311
        %vm1328 = vmor %vm1248, %vm1312
        %vm1329 = vmor %vm1249, %vm1313
        %vm1330 = vmor %vm1250, %vm1314
        %vm1331 = vmor %vm1251, %vm1315
        %vm1332 = vmor %vm1252, %vm1316
        %vm1333 = vmor %vm1253, %vm1317
        %vm1334 = vmor %vm1254, %vm1318
        %vm1335 = vmor %vm1255, %vm1319
        %vm1336 = vmor %vm1256, %vm1320
        %vm1337 = vmor %vm1257, %vm1321
        %vm1338 = vmor %vm1258, %vm1322
        %vm1339 = vmor %vm1259, %vm1323
        %1340 = vset.pattern.permute.xlu0 6
        %1341 = vperm.xlu0 %1340, %v860
        %v1342 = vpop.permute.xlu0 %1341
        %1343 = vset.pattern.permute.xlu0 6
        %1344 = vperm.xlu0 %1343, %v861
        %v1345 = vpop.permute.xlu0 %1344
        %1346 = vset.pattern.permute.xlu0 6
        %1347 = vperm.xlu0 %1346, %v862
        %v1348 = vpop.permute.xlu0 %1347
        %1349 = vset.pattern.permute.xlu0 6
        %1350 = vperm.xlu0 %1349, %v863
        %v1351 = vpop.permute.xlu0 %1350
        %1352 = vset.pattern.permute.xlu0 6
        %1353 = vperm.xlu0 %1352, %v864
        %v1354 = vpop.permute.xlu0 %1353
        %1355 = vset.pattern.permute.xlu0 6
        %1356 = vperm.xlu0 %1355, %v865
        %v1357 = vpop.permute.xlu0 %1356
        %1358 = vset.pattern.permute.xlu0 6
        %1359 = vperm.xlu0 %1358, %v866
        %v1360 = vpop.permute.xlu0 %1359
        %1361 = vset.pattern.permute.xlu0 6
        %1362 = vperm.xlu0 %1361, %v867
        %v1363 = vpop.permute.xlu0 %1362
        %1364 = vset.pattern.permute.xlu0 6
        %1365 = vperm.xlu0 %1364, %v868
        %v1366 = vpop.permute.xlu0 %1365
        %1367 = vset.pattern.permute.xlu0 6
        %1368 = vperm.xlu0 %1367, %v869
        %v1369 = vpop.permute.xlu0 %1368
        %1370 = vset.pattern.permute.xlu0 6
        %1371 = vperm.xlu0 %1370, %v870
        %v1372 = vpop.permute.xlu0 %1371
        %1373 = vset.pattern.permute.xlu0 6
        %1374 = vperm.xlu0 %1373, %v871
        %v1375 = vpop.permute.xlu0 %1374
        %1376 = vset.pattern.permute.xlu0 6
        %1377 = vperm.xlu0 %1376, %v872
        %v1378 = vpop.permute.xlu0 %1377
        %1379 = vset.pattern.permute.xlu0 6
        %1380 = vperm.xlu0 %1379, %v873
        %v1381 = vpop.permute.xlu0 %1380
        %1382 = vset.pattern.permute.xlu0 6
        %1383 = vperm.xlu0 %1382, %v874
        %v1384 = vpop.permute.xlu0 %1383
        %1385 = vset.pattern.permute.xlu0 6
        %1386 = vperm.xlu0 %1385, %v875
        %v1387 = vpop.permute.xlu0 %1386
        %vm1388 = vcmp.eq.s32.totalorder %v1342, %v859
        %vm1389 = vcmp.eq.s32.totalorder %v1345, %v859
        %vm1390 = vcmp.eq.s32.totalorder %v1348, %v859
        %vm1391 = vcmp.eq.s32.totalorder %v1351, %v859
        %vm1392 = vcmp.eq.s32.totalorder %v1354, %v859
        %vm1393 = vcmp.eq.s32.totalorder %v1357, %v859
        %vm1394 = vcmp.eq.s32.totalorder %v1360, %v859
        %vm1395 = vcmp.eq.s32.totalorder %v1363, %v859
        %vm1396 = vcmp.eq.s32.totalorder %v1366, %v859
        %vm1397 = vcmp.eq.s32.totalorder %v1369, %v859
        %vm1398 = vcmp.eq.s32.totalorder %v1372, %v859
        %vm1399 = vcmp.eq.s32.totalorder %v1375, %v859
        %vm1400 = vcmp.eq.s32.totalorder %v1378, %v859
        %vm1401 = vcmp.eq.s32.totalorder %v1381, %v859
        %vm1402 = vcmp.eq.s32.totalorder %v1384, %v859
        %vm1403 = vcmp.eq.s32.totalorder %v1387, %v859
        %vm1404 = vmor %vm1324, %vm1388
        %vm1405 = vmor %vm1325, %vm1389
        %vm1406 = vmor %vm1326, %vm1390
        %vm1407 = vmor %vm1327, %vm1391
        %vm1408 = vmor %vm1328, %vm1392
        %vm1409 = vmor %vm1329, %vm1393
        %vm1410 = vmor %vm1330, %vm1394
        %vm1411 = vmor %vm1331, %vm1395
        %vm1412 = vmor %vm1332, %vm1396
        %vm1413 = vmor %vm1333, %vm1397
        %vm1414 = vmor %vm1334, %vm1398
        %vm1415 = vmor %vm1335, %vm1399
        %vm1416 = vmor %vm1336, %vm1400
        %vm1417 = vmor %vm1337, %vm1401
        %vm1418 = vmor %vm1338, %vm1402
        %vm1419 = vmor %vm1339, %vm1403
        %1420 = vset.pattern.permute.xlu0 7
        %1421 = vperm.xlu0 %1420, %v860
        %v1422 = vpop.permute.xlu0 %1421
        %1423 = vset.pattern.permute.xlu0 7
        %1424 = vperm.xlu0 %1423, %v861
        %v1425 = vpop.permute.xlu0 %1424
        %1426 = vset.pattern.permute.xlu0 7
        %1427 = vperm.xlu0 %1426, %v862
        %v1428 = vpop.permute.xlu0 %1427
        %1429 = vset.pattern.permute.xlu0 7
        %1430 = vperm.xlu0 %1429, %v863
        %v1431 = vpop.permute.xlu0 %1430
        %1432 = vset.pattern.permute.xlu0 7
        %1433 = vperm.xlu0 %1432, %v864
        %v1434 = vpop.permute.xlu0 %1433
        %1435 = vset.pattern.permute.xlu0 7
        %1436 = vperm.xlu0 %1435, %v865
        %v1437 = vpop.permute.xlu0 %1436
        %1438 = vset.pattern.permute.xlu0 7
        %1439 = vperm.xlu0 %1438, %v866
        %v1440 = vpop.permute.xlu0 %1439
        %1441 = vset.pattern.permute.xlu0 7
        %1442 = vperm.xlu0 %1441, %v867
        %v1443 = vpop.permute.xlu0 %1442
        %1444 = vset.pattern.permute.xlu0 7
        %1445 = vperm.xlu0 %1444, %v868
        %v1446 = vpop.permute.xlu0 %1445
        %1447 = vset.pattern.permute.xlu0 7
        %1448 = vperm.xlu0 %1447, %v869
        %v1449 = vpop.permute.xlu0 %1448
        %1450 = vset.pattern.permute.xlu0 7
        %1451 = vperm.xlu0 %1450, %v870
        %v1452 = vpop.permute.xlu0 %1451
        %1453 = vset.pattern.permute.xlu0 7
        %1454 = vperm.xlu0 %1453, %v871
        %v1455 = vpop.permute.xlu0 %1454
        %1456 = vset.pattern.permute.xlu0 7
        %1457 = vperm.xlu0 %1456, %v872
        %v1458 = vpop.permute.xlu0 %1457
        %1459 = vset.pattern.permute.xlu0 7
        %1460 = vperm.xlu0 %1459, %v873
        %v1461 = vpop.permute.xlu0 %1460
        %1462 = vset.pattern.permute.xlu0 7
        %1463 = vperm.xlu0 %1462, %v874
        %v1464 = vpop.permute.xlu0 %1463
        %1465 = vset.pattern.permute.xlu0 7
        %1466 = vperm.xlu0 %1465, %v875
        %v1467 = vpop.permute.xlu0 %1466
        %vm1468 = vcmp.eq.s32.totalorder %v1422, %v859
        %vm1469 = vcmp.eq.s32.totalorder %v1425, %v859
        %vm1470 = vcmp.eq.s32.totalorder %v1428, %v859
        %vm1471 = vcmp.eq.s32.totalorder %v1431, %v859
        %vm1472 = vcmp.eq.s32.totalorder %v1434, %v859
        %vm1473 = vcmp.eq.s32.totalorder %v1437, %v859
        %vm1474 = vcmp.eq.s32.totalorder %v1440, %v859
        %vm1475 = vcmp.eq.s32.totalorder %v1443, %v859
        %vm1476 = vcmp.eq.s32.totalorder %v1446, %v859
        %vm1477 = vcmp.eq.s32.totalorder %v1449, %v859
        %vm1478 = vcmp.eq.s32.totalorder %v1452, %v859
        %vm1479 = vcmp.eq.s32.totalorder %v1455, %v859
        %vm1480 = vcmp.eq.s32.totalorder %v1458, %v859
        %vm1481 = vcmp.eq.s32.totalorder %v1461, %v859
        %vm1482 = vcmp.eq.s32.totalorder %v1464, %v859
        %vm1483 = vcmp.eq.s32.totalorder %v1467, %v859
        %vm1484 = vmor %vm1404, %vm1468
        %vm1485 = vmor %vm1405, %vm1469
        %vm1486 = vmor %vm1406, %vm1470
        %vm1487 = vmor %vm1407, %vm1471
        %vm1488 = vmor %vm1408, %vm1472
        %vm1489 = vmor %vm1409, %vm1473
        %vm1490 = vmor %vm1410, %vm1474
        %vm1491 = vmor %vm1411, %vm1475
        %vm1492 = vmor %vm1412, %vm1476
        %vm1493 = vmor %vm1413, %vm1477
        %vm1494 = vmor %vm1414, %vm1478
        %vm1495 = vmor %vm1415, %vm1479
        %vm1496 = vmor %vm1416, %vm1480
        %vm1497 = vmor %vm1417, %vm1481
        %vm1498 = vmor %vm1418, %vm1482
        %vm1499 = vmor %vm1419, %vm1483
        %v1500 = vsel %vm1484, %v796, -inf
        %v1501 = vsel %vm1485, %v799, -inf
        %v1502 = vsel %vm1486, %v804, -inf
        %v1503 = vsel %vm1487, %v807, -inf
        %v1504 = vsel %vm1488, %v812, -inf
        %v1505 = vsel %vm1489, %v815, -inf
        %v1506 = vsel %vm1490, %v820, -inf
        %v1507 = vsel %vm1491, %v823, -inf
        %v1508 = vsel %vm1492, %v828, -inf
        %v1509 = vsel %vm1493, %v831, -inf
        %v1510 = vsel %vm1494, %v836, -inf
        %v1511 = vsel %vm1495, %v839, -inf
        %v1512 = vsel %vm1496, %v844, -inf
        %v1513 = vsel %vm1497, %v847, -inf
        %v1514 = vsel %vm1498, %v852, -inf
        %v1515 = vsel %vm1499, %v855, -inf
        %vm1516 = vcmask 523264
        %v1517 = vsel %vm1516, %v1500, -inf
        %1518 = vmax.xlane.f32.xlu0 %v1517
        %v1519 = vpop.xlane.xlu0 %1518
        %v1520 = vsel %vm1516, %v1501, -inf
        %1521 = vmax.xlane.f32.xlu0 %v1520
        %v1522 = vpop.xlane.xlu0 %1521
        %v1523 = vsel %vm1516, %v1502, -inf
        %1524 = vmax.xlane.f32.xlu0 %v1523
        %v1525 = vpop.xlane.xlu0 %1524
        %v1526 = vsel %vm1516, %v1503, -inf
        %1527 = vmax.xlane.f32.xlu0 %v1526
        %v1528 = vpop.xlane.xlu0 %1527
        %v1529 = vsel %vm1516, %v1504, -inf
        %1530 = vmax.xlane.f32.xlu0 %v1529
        %v1531 = vpop.xlane.xlu0 %1530
        %v1532 = vsel %vm1516, %v1505, -inf
        %1533 = vmax.xlane.f32.xlu0 %v1532
        %v1534 = vpop.xlane.xlu0 %1533
        %v1535 = vsel %vm1516, %v1506, -inf
        %1536 = vmax.xlane.f32.xlu0 %v1535
        %v1537 = vpop.xlane.xlu0 %1536
        %v1538 = vsel %vm1516, %v1507, -inf
        %1539 = vmax.xlane.f32.xlu0 %v1538
        %v1540 = vpop.xlane.xlu0 %1539
        %v1541 = vsel %vm1516, %v1508, -inf
        %1542 = vmax.xlane.f32.xlu0 %v1541
        %v1543 = vpop.xlane.xlu0 %1542
        %v1544 = vsel %vm1516, %v1509, -inf
        %1545 = vmax.xlane.f32.xlu0 %v1544
        %v1546 = vpop.xlane.xlu0 %1545
        %v1547 = vsel %vm1516, %v1510, -inf
        %1548 = vmax.xlane.f32.xlu0 %v1547
        %v1549 = vpop.xlane.xlu0 %1548
        %v1550 = vsel %vm1516, %v1511, -inf
        %1551 = vmax.xlane.f32.xlu0 %v1550
        %v1552 = vpop.xlane.xlu0 %1551
        %v1553 = vsel %vm1516, %v1512, -inf
        %1554 = vmax.xlane.f32.xlu0 %v1553
        %v1555 = vpop.xlane.xlu0 %1554
        %v1556 = vsel %vm1516, %v1513, -inf
        %1557 = vmax.xlane.f32.xlu0 %v1556
        %v1558 = vpop.xlane.xlu0 %1557
        %v1559 = vsel %vm1516, %v1514, -inf
        %1560 = vmax.xlane.f32.xlu0 %v1559
        %v1561 = vpop.xlane.xlu0 %1560
        %v1562 = vsel %vm1516, %v1515, -inf
        %1563 = vmax.xlane.f32.xlu0 %v1562
        %v1564 = vpop.xlane.xlu0 %1563
        %v1565 = vsub.f32 %v1500, %v1519
        %v1566 = vsub.f32 %v1501, %v1522
        %v1567 = vsub.f32 %v1502, %v1525
        %v1568 = vsub.f32 %v1503, %v1528
        %v1569 = vsub.f32 %v1504, %v1531
        %v1570 = vsub.f32 %v1505, %v1534
        %v1571 = vsub.f32 %v1506, %v1537
        %v1572 = vsub.f32 %v1507, %v1540
        %v1573 = vsub.f32 %v1508, %v1543
        %v1574 = vsub.f32 %v1509, %v1546
        %v1575 = vsub.f32 %v1510, %v1549
        %v1576 = vsub.f32 %v1511, %v1552
        %v1577 = vsub.f32 %v1512, %v1555
        %v1578 = vsub.f32 %v1513, %v1558
        %v1579 = vsub.f32 %v1514, %v1561
        %v1580 = vsub.f32 %v1515, %v1564
        %v1581 = vmul.f32 %v1565, 1.442695
        %v1582 = vpow.pop %v1581
        %v1583 = vmul.f32 %v1566, 1.442695
        %v1584 = vpow.pop %v1583
        %v1585 = vmul.f32 %v1567, 1.442695
        %v1586 = vpow.pop %v1585
        %v1587 = vmul.f32 %v1568, 1.442695
        %v1588 = vpow.pop %v1587
        %v1589 = vmul.f32 %v1569, 1.442695
        %v1590 = vpow.pop %v1589
        %v1591 = vmul.f32 %v1570, 1.442695
        %v1592 = vpow.pop %v1591
        %v1593 = vmul.f32 %v1571, 1.442695
        %v1594 = vpow.pop %v1593
        %v1595 = vmul.f32 %v1572, 1.442695
        %v1596 = vpow.pop %v1595
        %v1597 = vmul.f32 %v1573, 1.442695
        %v1598 = vpow.pop %v1597
        %v1599 = vmul.f32 %v1574, 1.442695
        %v1600 = vpow.pop %v1599
        %v1601 = vmul.f32 %v1575, 1.442695
        %v1602 = vpow.pop %v1601
        %v1603 = vmul.f32 %v1576, 1.442695
        %v1604 = vpow.pop %v1603
        %v1605 = vmul.f32 %v1577, 1.442695
        %v1606 = vpow.pop %v1605
        %v1607 = vmul.f32 %v1578, 1.442695
        %v1608 = vpow.pop %v1607
        %v1609 = vmul.f32 %v1579, 1.442695
        %v1610 = vpow.pop %v1609
        %v1611 = vmul.f32 %v1580, 1.442695
        %v1612 = vpow.pop %v1611
        %v1613 = vsel %vm1516, %v1582, 0.0
        %1614 = vadd.xlane.f32.xlu0 %v1613
        %v1615 = vpop.xlane.xlu0 %1614
        %v1616 = vsel %vm1516, %v1584, 0.0
        %1617 = vadd.xlane.f32.xlu0 %v1616
        %v1618 = vpop.xlane.xlu0 %1617
        %v1619 = vsel %vm1516, %v1586, 0.0
        %1620 = vadd.xlane.f32.xlu0 %v1619
        %v1621 = vpop.xlane.xlu0 %1620
        %v1622 = vsel %vm1516, %v1588, 0.0
        %1623 = vadd.xlane.f32.xlu0 %v1622
        %v1624 = vpop.xlane.xlu0 %1623
        %v1625 = vsel %vm1516, %v1590, 0.0
        %1626 = vadd.xlane.f32.xlu0 %v1625
        %v1627 = vpop.xlane.xlu0 %1626
        %v1628 = vsel %vm1516, %v1592, 0.0
        %1629 = vadd.xlane.f32.xlu0 %v1628
        %v1630 = vpop.xlane.xlu0 %1629
        %v1631 = vsel %vm1516, %v1594, 0.0
        %1632 = vadd.xlane.f32.xlu0 %v1631
        %v1633 = vpop.xlane.xlu0 %1632
        %v1634 = vsel %vm1516, %v1596, 0.0
        %1635 = vadd.xlane.f32.xlu0 %v1634
        %v1636 = vpop.xlane.xlu0 %1635
        %v1637 = vsel %vm1516, %v1598, 0.0
        %1638 = vadd.xlane.f32.xlu0 %v1637
        %v1639 = vpop.xlane.xlu0 %1638
        %v1640 = vsel %vm1516, %v1600, 0.0
        %1641 = vadd.xlane.f32.xlu0 %v1640
        %v1642 = vpop.xlane.xlu0 %1641
        %v1643 = vsel %vm1516, %v1602, 0.0
        %1644 = vadd.xlane.f32.xlu0 %v1643
        %v1645 = vpop.xlane.xlu0 %1644
        %v1646 = vsel %vm1516, %v1604, 0.0
        %1647 = vadd.xlane.f32.xlu0 %v1646
        %v1648 = vpop.xlane.xlu0 %1647
        %v1649 = vsel %vm1516, %v1606, 0.0
        %1650 = vadd.xlane.f32.xlu0 %v1649
        %v1651 = vpop.xlane.xlu0 %1650
        %v1652 = vsel %vm1516, %v1608, 0.0
        %1653 = vadd.xlane.f32.xlu0 %v1652
        %v1654 = vpop.xlane.xlu0 %1653
        %v1655 = vsel %vm1516, %v1610, 0.0
        %1656 = vadd.xlane.f32.xlu0 %v1655
        %v1657 = vpop.xlane.xlu0 %1656
        %v1658 = vsel %vm1516, %v1612, 0.0
        %1659 = vadd.xlane.f32.xlu0 %v1658
        %v1660 = vpop.xlane.xlu0 %1659
        %v1661 = vrcp.pop %v1615
        %v1662 = vrcp.pop %v1618
        %v1663 = vrcp.pop %v1621
        %v1664 = vrcp.pop %v1624
        %v1665 = vrcp.pop %v1627
        %v1666 = vrcp.pop %v1630
        %v1667 = vrcp.pop %v1633
        %v1668 = vrcp.pop %v1636
        %v1669 = vrcp.pop %v1639
        %v1670 = vrcp.pop %v1642
        %v1671 = vrcp.pop %v1645
        %v1672 = vrcp.pop %v1648
        %v1673 = vrcp.pop %v1651
        %v1674 = vrcp.pop %v1654
        %v1675 = vrcp.pop %v1657
        %v1676 = vrcp.pop %v1660
        %v1677 = vmul.f32 %v1582, %v1661
        %v1678 = vmul.f32 %v1584, %v1662
        %v1679 = vmul.f32 %v1586, %v1663
        %v1680 = vmul.f32 %v1588, %v1664
        %v1681 = vmul.f32 %v1590, %v1665
        %v1682 = vmul.f32 %v1592, %v1666
        %v1683 = vmul.f32 %v1594, %v1667
        %v1684 = vmul.f32 %v1596, %v1668
        %v1685 = vmul.f32 %v1598, %v1669
        %v1686 = vmul.f32 %v1600, %v1670
        %v1687 = vmul.f32 %v1602, %v1671
        %v1688 = vmul.f32 %v1604, %v1672
        %v1689 = vmul.f32 %v1606, %v1673
        %v1690 = vmul.f32 %v1608, %v1674
        %v1691 = vmul.f32 %v1610, %v1675
        %v1692 = vmul.f32 %v1612, %v1676
        %v1693 = vpack.c.bf16 %v1678, %v1677
        %v1694 = vpack.c.bf16 %v1680, %v1679
        %v1695 = vpack.c.bf16 %v1682, %v1681
        %v1696 = vpack.c.bf16 %v1684, %v1683
        %v1697 = vpack.c.bf16 %v1686, %v1685
        %v1698 = vpack.c.bf16 %v1688, %v1687
        %v1699 = vpack.c.bf16 %v1690, %v1689
        %v1700 = vpack.c.bf16 %v1692, %v1691
        %v1701 = vld [vmem:[#allocation5] sm:$0xf]
        %v1702 = vld [vmem:[#allocation5 + $0x4] sm:$0xf]
        %v1703 = vld [vmem:[#allocation5 + $0x8] sm:$0xf]
        %v1704 = vld [vmem:[#allocation5 + $0xc] sm:$0xf]
        %v1705 = vld [vmem:[#allocation5 + $0x10] sm:$0xf]
        %v1706 = vld [vmem:[#allocation5 + $0x14] sm:$0xf]
        %v1707 = vld [vmem:[#allocation5 + $0x18] sm:$0xf]
        %v1708 = vld [vmem:[#allocation5 + $0x1c] sm:$0xf]
        %v1717 = vunpack.c.l.b16 %v1701
        %v1718 = vunpack.c.l.b16 %v1702
        %v1719 = vunpack.c.l.b16 %v1703
        %v1720 = vunpack.c.l.b16 %v1704
        %v1721 = vunpack.c.l.b16 %v1705
        %v1722 = vunpack.c.l.b16 %v1706
        %v1723 = vunpack.c.l.b16 %v1707
        %v1724 = vunpack.c.l.b16 %v1708
        %v1725 = vpack.c.b16 %v1718, %v1717
        %v1726 = vpack.c.b16 %v1720, %v1719
        %v1727 = vpack.c.b16 %v1722, %v1721
        %v1728 = vpack.c.b16 %v1724, %v1723
        %v1734 = vsel %vm1516, %v1693, 0
        %v1737 = vsel %vm1516, %v1694, 0
        %v1740 = vsel %vm1516, %v1695, 0
        %v1743 = vsel %vm1516, %v1696, 0
        %v1746 = vsel %vm1516, %v1697, 0
        %v1749 = vsel %vm1516, %v1698, 0
        %v1752 = vsel %vm1516, %v1699, 0
        %v1755 = vsel %vm1516, %v1700, 0
        %1757 = vmatprep.subr.bf16.mxu0 0
        %1758 = vmatpush1.bf16.msra.mxu0 %v1725
        %1759 = vmatprep.subr.bf16.mxu0 0
        %1760 = vmatpush1.bf16.msra.mxu0 %v1726
        %1761 = vmatprep.subr.bf16.mxu0 0
        %1762 = vmatpush1.bf16.msra.mxu0 %v1727
        %1763 = vmatprep.subr.bf16.mxu0 0
        %1764 = vmatpush1.bf16.msra.mxu0 %v1728
        %1765 = vmatprep.subr.bf16.mxu0 0
        %1766 = vmatpush1.bf16.msra.mxu0 0
        %1767 = vmatprep.subr.bf16.mxu0 0
        %1768 = vmatpush1.bf16.msra.mxu0 0
        %1769 = vmatprep.subr.bf16.mxu0 0
        %1770 = vmatpush1.bf16.msra.mxu0 0
        %1771 = vmatprep.subr.bf16.mxu0 0
        %1772 = vmatpush1.bf16.msra.mxu0 0
        %1773 = vmatprep.subr.bf16.mxu0 0
        %1774 = vmatpush1.bf16.msra.mxu0 0
        %1775 = vmatprep.subr.bf16.mxu0 0
        %1776 = vmatpush1.bf16.msra.mxu0 0
        %1777 = vmatprep.subr.bf16.mxu0 0
        %1778 = vmatpush1.bf16.msra.mxu0 0
        %1779 = vmatprep.subr.bf16.mxu0 0
        %1780 = vmatpush1.bf16.msra.mxu0 0
        %1781 = vmatprep.subr.bf16.mxu0 0
        %1782 = vmatpush1.bf16.msra.mxu0 0
        %1783 = vmatprep.subr.bf16.mxu0 0
        %1784 = vmatpush1.bf16.msra.mxu0 0
        %1785 = vmatprep.subr.bf16.mxu0 0
        %1786 = vmatpush1.bf16.msra.mxu0 0
        %1787 = vmatprep.subr.bf16.mxu0 0
        %1788 = vmatpush1.bf16.msra.mxu0 0
        %1789 = vmatprep.mubr.bf16.mxu0 0
        %1790 = vmatmul.mubr.bf16.gmra.mrb[0].mxu0 %v1734
        %v1791 = vpop.f32.mrb[0].mxu0
        %v1792 = vadd.f32 0.0, %v1791
        %v1793 = vpop.f32.mrb[0].mxu0
        %v1794 = vpop.f32.mrb[0].mxu0
        %v1795 = vadd.f32 0.0, %v1794
        %v1796 = vpop.f32.mrb[0].mxu0
        %1797 = vmatprep.mubr.bf16.mxu0 0
        %1798 = vmatmul.mubr.bf16.gmra.mrb[0].mxu0 %v1737
        %v1799 = vpop.f32.mrb[0].mxu0
        %v1800 = vadd.f32 0.0, %v1799
        %v1801 = vpop.f32.mrb[0].mxu0
        %v1802 = vpop.f32.mrb[0].mxu0
        %v1803 = vadd.f32 0.0, %v1802
        %v1804 = vpop.f32.mrb[0].mxu0
        %1805 = vmatprep.mubr.bf16.mxu0 0
        %1806 = vmatmul.mubr.bf16.gmra.mrb[0].mxu0 %v1740
        %v1807 = vpop.f32.mrb[0].mxu0
        %v1808 = vadd.f32 0.0, %v1807
        %v1809 = vpop.f32.mrb[0].mxu0
        %v1810 = vpop.f32.mrb[0].mxu0
        %v1811 = vadd.f32 0.0, %v1810
        %v1812 = vpop.f32.mrb[0].mxu0
        %1813 = vmatprep.mubr.bf16.mxu0 0
        %1814 = vmatmul.mubr.bf16.gmra.mrb[0].mxu0 %v1743
        %v1815 = vpop.f32.mrb[0].mxu0
        %v1816 = vadd.f32 0.0, %v1815
        %v1817 = vpop.f32.mrb[0].mxu0
        %v1818 = vpop.f32.mrb[0].mxu0
        %v1819 = vadd.f32 0.0, %v1818
        %v1820 = vpop.f32.mrb[0].mxu0
        %1821 = vmatprep.mubr.bf16.mxu0 0
        %1822 = vmatmul.mubr.bf16.gmra.mrb[0].mxu0 %v1746
        %v1823 = vpop.f32.mrb[0].mxu0
        %v1824 = vadd.f32 0.0, %v1823
        %v1825 = vpop.f32.mrb[0].mxu0
        %v1826 = vpop.f32.mrb[0].mxu0
        %v1827 = vadd.f32 0.0, %v1826
        %v1828 = vpop.f32.mrb[0].mxu0
        %1829 = vmatprep.mubr.bf16.mxu0 0
        %1830 = vmatmul.mubr.bf16.gmra.mrb[0].mxu0 %v1749
        %v1831 = vpop.f32.mrb[0].mxu0
        %v1832 = vadd.f32 0.0, %v1831
        %v1833 = vpop.f32.mrb[0].mxu0
        %v1834 = vpop.f32.mrb[0].mxu0
        %v1835 = vadd.f32 0.0, %v1834
        %v1836 = vpop.f32.mrb[0].mxu0
        %1837 = vmatprep.mubr.bf16.mxu0 0
        %1838 = vmatmul.mubr.bf16.gmra.mrb[0].mxu0 %v1752
        %v1839 = vpop.f32.mrb[0].mxu0
        %v1840 = vadd.f32 0.0, %v1839
        %v1841 = vpop.f32.mrb[0].mxu0
        %v1842 = vpop.f32.mrb[0].mxu0
        %v1843 = vadd.f32 0.0, %v1842
        %v1844 = vpop.f32.mrb[0].mxu0
        %1845 = vmatprep.mubr.bf16.mxu0 0
        %1846 = vmatmul.mubr.bf16.gmra.mrb[0].mxu0 %v1755
        %v1847 = vpop.f32.mrb[0].mxu0
        %v1848 = vadd.f32 0.0, %v1847
        %v1849 = vpop.f32.mrb[0].mxu0
        %v1850 = vpop.f32.mrb[0].mxu0
        %v1851 = vadd.f32 0.0, %v1850
        %v1852 = vpop.f32.mrb[0].mxu0
        %1853 = vdwg.mxu0
        %v1854 = vmul.f32 %v389, 0.5
        %v1855 = vmul.f32 %v390, 0.5
        %v1856 = vmul.f32 %v391, 0.5
        %v1857 = vmul.f32 %v392, 0.5
        %v1858 = vmul.f32 %v393, 0.5
        %v1859 = vmul.f32 %v394, 0.5
        %v1860 = vmul.f32 %v395, 0.5
        %v1861 = vmul.f32 %v396, 0.5
        %v1862 = vmul.f32 %v397, 0.5
        %v1863 = vmul.f32 %v398, 0.5
        %v1864 = vmul.f32 %v399, 0.5
        %v1865 = vmul.f32 %v400, 0.5
        %v1866 = vmul.f32 %v401, 0.5
        %v1867 = vmul.f32 %v402, 0.5
        %v1868 = vmul.f32 %v403, 0.5
        %v1869 = vmul.f32 %v404, 0.5
        %v1870 = vmul.f32 %v1792, 0.5
        %v1871 = vmul.f32 %v1795, 0.5
        %v1872 = vmul.f32 %v1800, 0.5
        %v1873 = vmul.f32 %v1803, 0.5
        %v1874 = vmul.f32 %v1808, 0.5
        %v1875 = vmul.f32 %v1811, 0.5
        %v1876 = vmul.f32 %v1816, 0.5
        %v1877 = vmul.f32 %v1819, 0.5
        %v1878 = vmul.f32 %v1824, 0.5
        %v1879 = vmul.f32 %v1827, 0.5
        %v1880 = vmul.f32 %v1832, 0.5
        %v1881 = vmul.f32 %v1835, 0.5
        %v1882 = vmul.f32 %v1840, 0.5
        %v1883 = vmul.f32 %v1843, 0.5
        %v1884 = vmul.f32 %v1848, 0.5
        %v1885 = vmul.f32 %v1851, 0.5
        %v1886 = vadd.f32 %v1854, %v1870
        %v1887 = vadd.f32 %v1855, %v1871
        %v1888 = vadd.f32 %v1856, %v1872
        %v1889 = vadd.f32 %v1857, %v1873
        %v1890 = vadd.f32 %v1858, %v1874
        %v1891 = vadd.f32 %v1859, %v1875
        %v1892 = vadd.f32 %v1860, %v1876
        %v1893 = vadd.f32 %v1861, %v1877
        %v1894 = vadd.f32 %v1862, %v1878
        %v1895 = vadd.f32 %v1863, %v1879
        %v1896 = vadd.f32 %v1864, %v1880
        %v1897 = vadd.f32 %v1865, %v1881
        %v1898 = vadd.f32 %v1866, %v1882
        %v1899 = vadd.f32 %v1867, %v1883
        %v1900 = vadd.f32 %v1868, %v1884
        %v1901 = vadd.f32 %v1869, %v1885
        %1902 = vst [vmem:[%s374] sm:$0xff] %v1886
        %1903 = vst [vmem:[%s374 + $0x8] sm:$0xff] %v1887
        %1904 = vst [vmem:[%s374 + $0x10] sm:$0xff] %v1888
        %1905 = vst [vmem:[%s374 + $0x18] sm:$0xff] %v1889
        %1906 = vst [vmem:[%s374 + $0x20] sm:$0xff] %v1890
        %1907 = vst [vmem:[%s374 + $0x28] sm:$0xff] %v1891
        %1908 = vst [vmem:[%s374 + $0x30] sm:$0xff] %v1892
        %1909 = vst [vmem:[%s374 + $0x38] sm:$0xff] %v1893
        %1910 = vst [vmem:[%s374 + $0x40] sm:$0xff] %v1894
        %1911 = vst [vmem:[%s374 + $0x48] sm:$0xff] %v1895
        %1912 = vst [vmem:[%s374 + $0x50] sm:$0xff] %v1896
        %1913 = vst [vmem:[%s374 + $0x58] sm:$0xff] %v1897
        %1914 = vst [vmem:[%s374 + $0x60] sm:$0xff] %v1898
        %1915 = vst [vmem:[%s374 + $0x68] sm:$0xff] %v1899
        %1916 = vst [vmem:[%s374 + $0x70] sm:$0xff] %v1900
        %1917 = vst [vmem:[%s374 + $0x78] sm:$0xff] %v1901
        %s1918 = sand.u32 %s211, 1
        %s1919 = scalar_lea.sflag [#allocation4], %s1918
        %s1920 = sand.u32 %s211, 1
        %s1921 = smul.addr %s1920, 128
        %s1922 = scalar_lea.vmem [#allocation10], %s1921
        // Predicated region
        $region69: #{tpu_custom_call.1} parent=51 // pred_check
          %p1923 = pneg %p221
        $region70: #{tpu_custom_call.1} parent=51 // pred_check_branch
          %1925 = sbr.rel (%p1923) target = $region72
        $region71: #{tpu_custom_call.1} parent=51 // pred_region
          %s1926 = smul.u32 16, %s25
          %s1928 = ssub.s32 2048, 2048
          %1929 = vsyncadd %s1919, %s1928
          %s1930 = smul.addr %s1926, 128
          %s1931 = scalar_lea.hbm %s8, %s1930
          %s1932 = sshll.u32 %s1922, 4
          %s1933 = int_to_ptr.vmem [resolvable:$true] %s1932
          %1938 = dma.vmem_to_hbm [thread:$0]  %s1933, 2048, %s1931, %s1919, 128, 128, 8
        $region72: #{tpu_custom_call.1} parent=51 // pred_fallthru
          _
      $region52: #{tpu_custom_call.1} parent=5 // pred_fallthru
        _
      %p1939 = scmp.le.s32.totalorder 2, %s20
      // Predicated region
      $region73: #{tpu_custom_call.1} parent=5 // pred_check
        %p1940 = pneg %p1939
      $region74: #{tpu_custom_call.1} parent=5 // pred_check_branch
        %1942 = sbr.rel (%p1940) target = $region76
      $region75: #{tpu_custom_call.1} parent=5 // pred_region
        %s1943 = ssub.s32 %s20, 2
        // Predicated region
        $region77: #{tpu_custom_call.1} parent=75 // pred_check
          %p1944 = pneg %p227
        $region78: #{tpu_custom_call.1} parent=75 // pred_check_branch
          %1946 = sbr.rel (%p1944) target = $region80
        $region79: #{tpu_custom_call.1} parent=75 // pred_region
          %s1947 = sand.u32 %s212, 1
          %s1948 = scalar_lea.sflag [#allocation4], %s1947
          %s1949 = sand.u32 %s212, 1
          %s1950 = smul.addr %s1949, 128
          %s1951 = scalar_lea.vmem [#allocation10], %s1950
          %1952 = dma.done %s1948, 2048
        $region80: #{tpu_custom_call.1} parent=75 // pred_fallthru
          _
      $region76: #{tpu_custom_call.1} parent=5 // pred_fallthru
        _
    $region6: #{tpu_custom_call.1} parent=1 // loop_footer
      %s24 = sadd.s32 1, %s20
    $region7: #{tpu_custom_call.1} parent=1 // loop_footer_branch
      %19 = sbr.rel target = $region3
    $region8: #{tpu_custom_call.1} parent=1 // loop_exit
      _
    %1953 = vsyncpa [#allocation3], 1
    %s1954 = scalar_lea.sflag [#allocation3], 1
    %1955 = vsyncpa %s1954, 1
    %1956 = vsyncpa [#allocation6], 1
    %1957 = vsyncpa [#allocation9], 1
    %1958 = vsyncpa [#allocation4], 1
    %s1959 = scalar_lea.sflag [#allocation4], 1
    %1960 = vsyncpa %s1959, 1

</llo_original>
